<compile_context>
chip_gen: v6e
topology: v6e:2x2x1
jax: 0.10.0
libtpu: 0.0.40
codegen_flags: <defaults>
</compile_context>

<pallas_src>
import functools
import math

import jax
import jax.numpy as jnp
from jax.experimental import pallas as pl
from jax.experimental.pallas import tpu as pltpu  # noqa: F401  (TPU backend; kept for parity)


def _mha_kernel(x_ref, w_qkv_ref, b_qkv_ref, wo_ref, bo_ref, out_ref,
                *, B: int, Sq: int, Sk: int, n_heads: int, key_dim: int):
    Dh = n_heads * key_dim
    nq = B * Sq
    nk = B * Sk

    # --- fused QKV projection: one MXU matmul for all three linears -----------
    # x_ref rows are [query (nq) ; key (nk) ; value (nk)], w_qkv columns are
    # [Wq (Dh) | Wk (Dh) | Wv (Dh)].  Take the matching diagonal blocks.
    y = jnp.dot(x_ref[...], w_qkv_ref[...], preferred_element_type=jnp.float32)

    q = (y[0:nq, 0:Dh] + b_qkv_ref[:, 0:Dh]).reshape(B, Sq, Dh)
    k = (y[nq:nq + nk, Dh:2 * Dh] + b_qkv_ref[:, Dh:2 * Dh]).reshape(B, Sk, Dh)
    v = (y[nq + nk:nq + 2 * nk, 2 * Dh:3 * Dh] + b_qkv_ref[:, 2 * Dh:3 * Dh]).reshape(B, Sk, Dh)

    scale = 1.0 / math.sqrt(key_dim)

    # TODO(synk): optional `mask` argument of the PyTorch module is not plumbed
    # through (callers pass mask=None); it would be a jnp.where on `s` if needed.
    head_outs = []
    for h in range(n_heads):                      # static unroll over heads
        sl = slice(h * key_dim, (h + 1) * key_dim)
        qh = q[:, :, sl]                          # (B, Sq, Kd)
        kh = k[:, :, sl]                          # (B, Sk, Kd)
        vh = v[:, :, sl]                          # (B, Sk, Kd)

        # Batched over B; contraction on the last dim of BOTH operands -> no .T.
        s = jnp.einsum("bqd,bkd->bqk", qh, kh,
                       preferred_element_type=jnp.float32) * scale      # (B, Sq, Sk)
        s = s - jnp.max(s, axis=-1, keepdims=True)                      # stable softmax
        p = jnp.exp(s)
        p = p * pl.reciprocal(jnp.sum(p, axis=-1, keepdims=True), approx=True)
        head_outs.append(jnp.einsum("bqk,bkd->bqd", p, vh,
                                    preferred_element_type=jnp.float32))  # (B, Sq, Kd)

    # Head-concat order matches PyTorch's transpose(1,2).contiguous().view(...).
    concat = jnp.concatenate(head_outs, axis=-1).reshape(nq, Dh)          # (B*Sq, Dh)

    out = jnp.dot(concat, wo_ref[...], preferred_element_type=jnp.float32) + bo_ref[...]
    out_ref[...] = out.astype(out_ref.dtype)      # single lane-dense (B*Sq, Din) store


def attention_module_forward(query, key, value, params, *, n_heads: int, key_dim: int):
    """Pallas-backed equivalent of AttentionModule.forward (mask=None)."""
    B, Sq, Din = query.shape
    _, Sk, _ = key.shape
    Dh = n_heads * key_dim

    wq, bq, wk, bk, wv, bv, wo, bo = params

    # Wrapper-side packing (cheap XLA ops, done once per call):
    w_qkv = jnp.concatenate([wq, wk, wv], axis=1)          # (Din, 3*Dh)
    b_qkv = jnp.concatenate([bq, bk, bv], axis=1)          # (1, 3*Dh)
    x_cat = jnp.concatenate([query.reshape(B * Sq, Din),
                             key.reshape(B * Sk, Din),
                             value.reshape(B * Sk, Din)], axis=0)   # (B*(Sq+2*Sk), Din)

    kernel = functools.partial(_mha_kernel, B=B, Sq=Sq, Sk=Sk,
                               n_heads=n_heads, key_dim=key_dim)

    # No grid: a single kernel invocation, all operands resident in VMEM
    # (<0.2 MiB total — fine on v5e/v6e and on v7x's 64 MiB).  No pipelining
    # means no double-buffered weight copies and no per-step overhead.
    out2d = pl.pallas_call(
        kernel,
        out_shape=jax.ShapeDtypeStruct((B * Sq, Din), query.dtype),
    )(x_cat, w_qkv, b_qkv, wo, bo)

    return out2d.reshape(B, Sq, Din)


def _reference_forward(query, key, value, params, *, n_heads, key_dim):
    """Pure-JAX reference mirroring the PyTorch forward (for validation)."""
    wq, bq, wk, bk, wv, bv, wo, bo = params
    B, Sq, _ = query.shape

    def proj(x, w, b):
        y = x @ w + b[0]
        return y.reshape(x.shape[0], x.shape[1], n_heads, key_dim).transpose(0, 2, 1, 3)

    q = proj(query, wq, bq)
    k = proj(key, wk, bk)
    v = proj(value, wv, bv)
    scores = jnp.einsum("bhqd,bhkd->bhqk", q, k) / math.sqrt(key_dim)
    attn = jax.nn.softmax(scores, axis=-1)
    out = jnp.einsum("bhqk,bhkd->bhqd", attn, v)
    out = out.transpose(0, 2, 1, 3).reshape(B, Sq, n_heads * key_dim)
    return out @ wo + bo[0]


def init_params(rng, input_dim, n_heads, key_dim, dtype=jnp.float32):
    Dh = n_heads * key_dim
    ks = jax.random.split(rng, 8)

    def lin(kw, kb, fan_in, fan_out):
        bound = 1.0 / math.sqrt(fan_in)
        w = jax.random.uniform(kw, (fan_in, fan_out), dtype, -bound, bound)
        b = jax.random.uniform(kb, (1, fan_out), dtype, -bound, bound)
        return w, b

    wq, bq = lin(ks[0], ks[1], input_dim, Dh)
    wk, bk = lin(ks[2], ks[3], input_dim, Dh)
    wv, bv = lin(ks[4], ks[5], input_dim, Dh)
    wo, bo = lin(ks[6], ks[7], Dh, input_dim)
    return (wq, bq, wk, bk, wv, bv, wo, bo)


if __name__ == "__main__":
    INPUT_DIM = 32
    N_HEADS = 4
    KEY_DIM = 64
    B, SEQ = 2, 8

    root = jax.random.PRNGKey(0)
    k_p, k_q, k_k, k_v = jax.random.split(root, 4)

    params = init_params(k_p, INPUT_DIM, N_HEADS, KEY_DIM)
    query = jax.random.normal(k_q, (B, SEQ, INPUT_DIM), jnp.float32)
    key = jax.random.normal(k_k, (B, SEQ, INPUT_DIM), jnp.float32)
    value = jax.random.normal(k_v, (B, SEQ, INPUT_DIM), jnp.float32)

    out = attention_module_forward(query, key, value, params,
                                   n_heads=N_HEADS, key_dim=KEY_DIM)
    out = jax.block_until_ready(out)

    ref = _reference_forward(query, key, value, params,
                             n_heads=N_HEADS, key_dim=KEY_DIM)
    assert out.shape == (B, SEQ, INPUT_DIM)
    # Tolerance covers the EUP approximate reciprocal in the softmax denominator.
    assert jnp.allclose(out, ref, atol=5e-3, rtol=5e-3), "mismatch vs. reference"

    print("KERNEL_OK")
</pallas_src>

<mosaic_0001>
module attributes {stable_mosaic.version = 11 : i64} {
  func.func @_mha_kernel(%arg0: memref<48x32xf32, #tpu.memory_space<vmem>>, %arg1: memref<32x768xf32, #tpu.memory_space<vmem>>, %arg2: memref<1x768xf32, #tpu.memory_space<vmem>>, %arg3: memref<256x32xf32, #tpu.memory_space<vmem>>, %arg4: memref<1x32xf32, #tpu.memory_space<vmem>>, %arg5: memref<16x32xf32, #tpu.memory_space<vmem>>) attributes {dimension_semantics = [], scalar_prefetch = 0 : i64, scratch_operands = 0 : i64, tpu.core_type = #tpu.core_type<tc>} {
    %c0 = arith.constant 0 : index
    %c0_0 = arith.constant 0 : index
    %0 = vector.load %arg0[%c0, %c0_0] : memref<48x32xf32, #tpu.memory_space<vmem>>, vector<48x32xf32>
    %c0_1 = arith.constant 0 : index
    %c0_2 = arith.constant 0 : index
    %1 = vector.load %arg1[%c0_1, %c0_2] : memref<32x768xf32, #tpu.memory_space<vmem>>, vector<32x768xf32>
    %cst = arith.constant dense<0.000000e+00> : vector<48x768xf32>
    %2 = tpu.matmul %0, %1, %cst {dimension_numbers = #tpu.dot_dimension_numbers<[1], [0], [0], [1], [0, 0, 1, 1], [], []>} : vector<48x32xf32>, vector<32x768xf32>, vector<48x768xf32> -> vector<48x768xf32>
    %3 = vector.extract_strided_slice %2 {offsets = [0, 0], sizes = [16, 256], strides = [1, 1]} : vector<48x768xf32> to vector<16x256xf32>
    %c0_3 = arith.constant 0 : index
    %c0_4 = arith.constant 0 : index
    %4 = vector.load %arg2[%c0_3, %c0_4] : memref<1x768xf32, #tpu.memory_space<vmem>>, vector<1x256xf32>
    %5 = vector.broadcast %4 : vector<1x256xf32> to vector<16x256xf32>
    %6 = arith.addf %3, %5 : vector<16x256xf32>
    %7 = vector.shape_cast %6 : vector<16x256xf32> to vector<2x8x256xf32>
    %8 = vector.extract_strided_slice %2 {offsets = [16, 256], sizes = [16, 256], strides = [1, 1]} : vector<48x768xf32> to vector<16x256xf32>
    %c0_5 = arith.constant 0 : index
    %c256 = arith.constant 256 : index
    %9 = vector.load %arg2[%c0_5, %c256] : memref<1x768xf32, #tpu.memory_space<vmem>>, vector<1x256xf32>
    %10 = vector.broadcast %9 : vector<1x256xf32> to vector<16x256xf32>
    %11 = arith.addf %8, %10 : vector<16x256xf32>
    %12 = vector.shape_cast %11 : vector<16x256xf32> to vector<2x8x256xf32>
    %13 = vector.extract_strided_slice %2 {offsets = [32, 512], sizes = [16, 256], strides = [1, 1]} : vector<48x768xf32> to vector<16x256xf32>
    %c0_6 = arith.constant 0 : index
    %c512 = arith.constant 512 : index
    %14 = vector.load %arg2[%c0_6, %c512] : memref<1x768xf32, #tpu.memory_space<vmem>>, vector<1x256xf32>
    %15 = vector.broadcast %14 : vector<1x256xf32> to vector<16x256xf32>
    %16 = arith.addf %13, %15 : vector<16x256xf32>
    %17 = vector.shape_cast %16 : vector<16x256xf32> to vector<2x8x256xf32>
    %18 = vector.extract_strided_slice %7 {offsets = [0, 0, 0], sizes = [2, 8, 64], strides = [1, 1, 1]} : vector<2x8x256xf32> to vector<2x8x64xf32>
    %19 = vector.extract_strided_slice %12 {offsets = [0, 0, 0], sizes = [2, 8, 64], strides = [1, 1, 1]} : vector<2x8x256xf32> to vector<2x8x64xf32>
    %20 = vector.extract_strided_slice %17 {offsets = [0, 0, 0], sizes = [2, 8, 64], strides = [1, 1, 1]} : vector<2x8x256xf32> to vector<2x8x64xf32>
    "tpu.trace_start"() <{level = 10 : i32, message = "bqd,bkd->bqk"}> : () -> ()
    %cst_7 = arith.constant dense<0.000000e+00> : vector<2x8x8xf32>
    %21 = tpu.matmul %18, %19, %cst_7 {dimension_numbers = #tpu.dot_dimension_numbers<[2], [2], [1], [1], [0, 0, 0, 1, 1, 1], [0], [0]>} : vector<2x8x64xf32>, vector<2x8x64xf32>, vector<2x8x8xf32> -> vector<2x8x8xf32>
    "tpu.trace_stop"() : () -> ()
    %cst_8 = arith.constant 1.250000e-01 : f32
    %22 = vector.broadcast %cst_8 : f32 to vector<2x8x8xf32>
    %23 = arith.mulf %21, %22 : vector<2x8x8xf32>
    %cst_9 = arith.constant dense<0xFF800000> : vector<2x8xf32>
    %24 = vector.multi_reduction <maximumf>, %23, %cst_9 [2] : vector<2x8x8xf32> to vector<2x8xf32>
    %25 = vector.shape_cast %24 : vector<2x8xf32> to vector<2x8x1xf32>
    %26 = vector.broadcast %25 : vector<2x8x1xf32> to vector<2x8x8xf32>
    %27 = arith.subf %23, %26 : vector<2x8x8xf32>
    %28 = math.exp %27 : vector<2x8x8xf32>
    %cst_10 = arith.constant dense<0.000000e+00> : vector<2x8xf32>
    %29 = vector.multi_reduction <add>, %28, %cst_10 [2] : vector<2x8x8xf32> to vector<2x8xf32>
    %30 = vector.shape_cast %29 : vector<2x8xf32> to vector<2x8x1xf32>
    %31 = tpu.reciprocal %30 {approx = true} : vector<2x8x1xf32> -> vector<2x8x1xf32>
    %32 = vector.broadcast %31 : vector<2x8x1xf32> to vector<2x8x8xf32>
    %33 = arith.mulf %28, %32 : vector<2x8x8xf32>
    "tpu.trace_start"() <{level = 10 : i32, message = "bqk,bkd->bqd"}> : () -> ()
    %cst_11 = arith.constant dense<0.000000e+00> : vector<2x8x64xf32>
    %34 = tpu.matmul %33, %20, %cst_11 {dimension_numbers = #tpu.dot_dimension_numbers<[2], [1], [1], [2], [0, 0, 0, 1, 1, 2], [0], [0]>} : vector<2x8x8xf32>, vector<2x8x64xf32>, vector<2x8x64xf32> -> vector<2x8x64xf32>
    "tpu.trace_stop"() : () -> ()
    %35 = vector.extract_strided_slice %7 {offsets = [0, 0, 64], sizes = [2, 8, 64], strides = [1, 1, 1]} : vector<2x8x256xf32> to vector<2x8x64xf32>
    %36 = vector.extract_strided_slice %12 {offsets = [0, 0, 64], sizes = [2, 8, 64], strides = [1, 1, 1]} : vector<2x8x256xf32> to vector<2x8x64xf32>
    %37 = vector.extract_strided_slice %17 {offsets = [0, 0, 64], sizes = [2, 8, 64], strides = [1, 1, 1]} : vector<2x8x256xf32> to vector<2x8x64xf32>
    "tpu.trace_start"() <{level = 10 : i32, message = "bqd,bkd->bqk"}> : () -> ()
    %cst_12 = arith.constant dense<0.000000e+00> : vector<2x8x8xf32>
    %38 = tpu.matmul %35, %36, %cst_12 {dimension_numbers = #tpu.dot_dimension_numbers<[2], [2], [1], [1], [0, 0, 0, 1, 1, 1], [0], [0]>} : vector<2x8x64xf32>, vector<2x8x64xf32>, vector<2x8x8xf32> -> vector<2x8x8xf32>
    "tpu.trace_stop"() : () -> ()
    %cst_13 = arith.constant 1.250000e-01 : f32
    %39 = vector.broadcast %cst_13 : f32 to vector<2x8x8xf32>
    %40 = arith.mulf %38, %39 : vector<2x8x8xf32>
    %cst_14 = arith.constant dense<0xFF800000> : vector<2x8xf32>
    %41 = vector.multi_reduction <maximumf>, %40, %cst_14 [2] : vector<2x8x8xf32> to vector<2x8xf32>
    %42 = vector.shape_cast %41 : vector<2x8xf32> to vector<2x8x1xf32>
    %43 = vector.broadcast %42 : vector<2x8x1xf32> to vector<2x8x8xf32>
    %44 = arith.subf %40, %43 : vector<2x8x8xf32>
    %45 = math.exp %44 : vector<2x8x8xf32>
    %cst_15 = arith.constant dense<0.000000e+00> : vector<2x8xf32>
    %46 = vector.multi_reduction <add>, %45, %cst_15 [2] : vector<2x8x8xf32> to vector<2x8xf32>
    %47 = vector.shape_cast %46 : vector<2x8xf32> to vector<2x8x1xf32>
    %48 = tpu.reciprocal %47 {approx = true} : vector<2x8x1xf32> -> vector<2x8x1xf32>
    %49 = vector.broadcast %48 : vector<2x8x1xf32> to vector<2x8x8xf32>
    %50 = arith.mulf %45, %49 : vector<2x8x8xf32>
    "tpu.trace_start"() <{level = 10 : i32, message = "bqk,bkd->bqd"}> : () -> ()
    %cst_16 = arith.constant dense<0.000000e+00> : vector<2x8x64xf32>
    %51 = tpu.matmul %50, %37, %cst_16 {dimension_numbers = #tpu.dot_dimension_numbers<[2], [1], [1], [2], [0, 0, 0, 1, 1, 2], [0], [0]>} : vector<2x8x8xf32>, vector<2x8x64xf32>, vector<2x8x64xf32> -> vector<2x8x64xf32>
    "tpu.trace_stop"() : () -> ()
    %52 = vector.extract_strided_slice %7 {offsets = [0, 0, 128], sizes = [2, 8, 64], strides = [1, 1, 1]} : vector<2x8x256xf32> to vector<2x8x64xf32>
    %53 = vector.extract_strided_slice %12 {offsets = [0, 0, 128], sizes = [2, 8, 64], strides = [1, 1, 1]} : vector<2x8x256xf32> to vector<2x8x64xf32>
    %54 = vector.extract_strided_slice %17 {offsets = [0, 0, 128], sizes = [2, 8, 64], strides = [1, 1, 1]} : vector<2x8x256xf32> to vector<2x8x64xf32>
    "tpu.trace_start"() <{level = 10 : i32, message = "bqd,bkd->bqk"}> : () -> ()
    %cst_17 = arith.constant dense<0.000000e+00> : vector<2x8x8xf32>
    %55 = tpu.matmul %52, %53, %cst_17 {dimension_numbers = #tpu.dot_dimension_numbers<[2], [2], [1], [1], [0, 0, 0, 1, 1, 1], [0], [0]>} : vector<2x8x64xf32>, vector<2x8x64xf32>, vector<2x8x8xf32> -> vector<2x8x8xf32>
    "tpu.trace_stop"() : () -> ()
    %cst_18 = arith.constant 1.250000e-01 : f32
    %56 = vector.broadcast %cst_18 : f32 to vector<2x8x8xf32>
    %57 = arith.mulf %55, %56 : vector<2x8x8xf32>
    %cst_19 = arith.constant dense<0xFF800000> : vector<2x8xf32>
    %58 = vector.multi_reduction <maximumf>, %57, %cst_19 [2] : vector<2x8x8xf32> to vector<2x8xf32>
    %59 = vector.shape_cast %58 : vector<2x8xf32> to vector<2x8x1xf32>
    %60 = vector.broadcast %59 : vector<2x8x1xf32> to vector<2x8x8xf32>
    %61 = arith.subf %57, %60 : vector<2x8x8xf32>
    %62 = math.exp %61 : vector<2x8x8xf32>
    %cst_20 = arith.constant dense<0.000000e+00> : vector<2x8xf32>
    %63 = vector.multi_reduction <add>, %62, %cst_20 [2] : vector<2x8x8xf32> to vector<2x8xf32>
    %64 = vector.shape_cast %63 : vector<2x8xf32> to vector<2x8x1xf32>
    %65 = tpu.reciprocal %64 {approx = true} : vector<2x8x1xf32> -> vector<2x8x1xf32>
    %66 = vector.broadcast %65 : vector<2x8x1xf32> to vector<2x8x8xf32>
    %67 = arith.mulf %62, %66 : vector<2x8x8xf32>
    "tpu.trace_start"() <{level = 10 : i32, message = "bqk,bkd->bqd"}> : () -> ()
    %cst_21 = arith.constant dense<0.000000e+00> : vector<2x8x64xf32>
    %68 = tpu.matmul %67, %54, %cst_21 {dimension_numbers = #tpu.dot_dimension_numbers<[2], [1], [1], [2], [0, 0, 0, 1, 1, 2], [0], [0]>} : vector<2x8x8xf32>, vector<2x8x64xf32>, vector<2x8x64xf32> -> vector<2x8x64xf32>
    "tpu.trace_stop"() : () -> ()
    %69 = vector.extract_strided_slice %7 {offsets = [0, 0, 192], sizes = [2, 8, 64], strides = [1, 1, 1]} : vector<2x8x256xf32> to vector<2x8x64xf32>
    %70 = vector.extract_strided_slice %12 {offsets = [0, 0, 192], sizes = [2, 8, 64], strides = [1, 1, 1]} : vector<2x8x256xf32> to vector<2x8x64xf32>
    %71 = vector.extract_strided_slice %17 {offsets = [0, 0, 192], sizes = [2, 8, 64], strides = [1, 1, 1]} : vector<2x8x256xf32> to vector<2x8x64xf32>
    "tpu.trace_start"() <{level = 10 : i32, message = "bqd,bkd->bqk"}> : () -> ()
    %cst_22 = arith.constant dense<0.000000e+00> : vector<2x8x8xf32>
    %72 = tpu.matmul %69, %70, %cst_22 {dimension_numbers = #tpu.dot_dimension_numbers<[2], [2], [1], [1], [0, 0, 0, 1, 1, 1], [0], [0]>} : vector<2x8x64xf32>, vector<2x8x64xf32>, vector<2x8x8xf32> -> vector<2x8x8xf32>
    "tpu.trace_stop"() : () -> ()
    %cst_23 = arith.constant 1.250000e-01 : f32
    %73 = vector.broadcast %cst_23 : f32 to vector<2x8x8xf32>
    %74 = arith.mulf %72, %73 : vector<2x8x8xf32>
    %cst_24 = arith.constant dense<0xFF800000> : vector<2x8xf32>
    %75 = vector.multi_reduction <maximumf>, %74, %cst_24 [2] : vector<2x8x8xf32> to vector<2x8xf32>
    %76 = vector.shape_cast %75 : vector<2x8xf32> to vector<2x8x1xf32>
    %77 = vector.broadcast %76 : vector<2x8x1xf32> to vector<2x8x8xf32>
    %78 = arith.subf %74, %77 : vector<2x8x8xf32>
    %79 = math.exp %78 : vector<2x8x8xf32>
    %cst_25 = arith.constant dense<0.000000e+00> : vector<2x8xf32>
    %80 = vector.multi_reduction <add>, %79, %cst_25 [2] : vector<2x8x8xf32> to vector<2x8xf32>
    %81 = vector.shape_cast %80 : vector<2x8xf32> to vector<2x8x1xf32>
    %82 = tpu.reciprocal %81 {approx = true} : vector<2x8x1xf32> -> vector<2x8x1xf32>
    %83 = vector.broadcast %82 : vector<2x8x1xf32> to vector<2x8x8xf32>
    %84 = arith.mulf %79, %83 : vector<2x8x8xf32>
    "tpu.trace_start"() <{level = 10 : i32, message = "bqk,bkd->bqd"}> : () -> ()
    %cst_26 = arith.constant dense<0.000000e+00> : vector<2x8x64xf32>
    %85 = tpu.matmul %84, %71, %cst_26 {dimension_numbers = #tpu.dot_dimension_numbers<[2], [1], [1], [2], [0, 0, 0, 1, 1, 2], [0], [0]>} : vector<2x8x8xf32>, vector<2x8x64xf32>, vector<2x8x64xf32> -> vector<2x8x64xf32>
    "tpu.trace_stop"() : () -> ()
    %86 = tpu.concatenate %34, %51, %68, %85 in 2 : vector<2x8x64xf32>, vector<2x8x64xf32>, vector<2x8x64xf32>, vector<2x8x64xf32> -> vector<2x8x256xf32>
    %87 = vector.shape_cast %86 : vector<2x8x256xf32> to vector<16x256xf32>
    %c0_27 = arith.constant 0 : index
    %c0_28 = arith.constant 0 : index
    %88 = vector.load %arg3[%c0_27, %c0_28] : memref<256x32xf32, #tpu.memory_space<vmem>>, vector<256x32xf32>
    %cst_29 = arith.constant dense<0.000000e+00> : vector<16x32xf32>
    %89 = tpu.matmul %87, %88, %cst_29 {dimension_numbers = #tpu.dot_dimension_numbers<[1], [0], [0], [1], [0, 0, 1, 1], [], []>} : vector<16x256xf32>, vector<256x32xf32>, vector<16x32xf32> -> vector<16x32xf32>
    %c0_30 = arith.constant 0 : index
    %c0_31 = arith.constant 0 : index
    %90 = vector.load %arg4[%c0_30, %c0_31] : memref<1x32xf32, #tpu.memory_space<vmem>>, vector<1x32xf32>
    %91 = vector.broadcast %90 : vector<1x32xf32> to vector<16x32xf32>
    %92 = arith.addf %89, %91 : vector<16x32xf32>
    %c0_32 = arith.constant 0 : index
    %c0_33 = arith.constant 0 : index
    %93 = vector.load %arg5[%c0_32, %c0_33] : memref<16x32xf32, #tpu.memory_space<vmem>>, vector<16x32xf32>
    tpu.vector_store %arg5[%c0_32, %c0_33], %92 {strides = array<i32>} : memref<16x32xf32, #tpu.memory_space<vmem>>, vector<16x32xf32>,
    return
  }
}

</mosaic_0001>

<llo_original>
// kernel: tpu_custom_call.1
$region0: #{tpu_custom_call.1}
  #allocation0 [shape = 'u32[]', space=smem, size = 0x4, offset = 0x4, fixed_abs, tag = 'smem constant byte address 0x4 - core index']
  #allocation1 [shape = 'u32[144,128]{1,0:T(1,128)}', space=vmem, size = 0x12000, scoped, tag = 'internal scratch']
  %s0 = inlined_call_operand.vmem [shape: f32[48,32], index: 0, kind: input, shape index: {}]
  %s1 = inlined_call_operand.vmem [shape: f32[32,768], index: 1, kind: input, shape index: {}]
  %s2 = inlined_call_operand.vmem [shape: f32[1,768], index: 2, kind: input, shape index: {}]
  %s3 = inlined_call_operand.vmem [shape: f32[256,32], index: 3, kind: input, shape index: {}]
  %s4 = inlined_call_operand.vmem [shape: f32[1,32], index: 4, kind: input, shape index: {}]
  %s5 = inlined_call_operand.hbm [shape: f32[16,32], index: 5, kind: output, shape index: {}]
  %s6 = sld [smem:[#allocation0]]
  $region30: #{tpu_custom_call.1} parent=0
    _
  %s8 = ssub.s32 1, %s6
  %s9 = scalar_select 0, %s8, %s6
  $region1: #{tpu_custom_call.1} parent=0
    #allocation2 [shape = 'u8[8192]{0}', space=vmem, size = 0x2000, scoped, tag = 'output window, operand 0, single buffered']
    #allocation3 [shape = 's32[1]{0}', space=sflag, size = 0x4, scoped, tag = 'scoped memory for tpu_custom_call.1']
    %10 = vsyncpa [#allocation3], 0
    // Predicated region
    $region2: #{tpu_custom_call.1} parent=1 // pred_check
      _
    $region3: #{tpu_custom_call.1} parent=1 // pred_check_branch
      %12 = sbr.rel (0) target = $region5
    $region4: #{tpu_custom_call.1} parent=1 // pred_region
      _
    $region5: #{tpu_custom_call.1} parent=1 // pred_fallthru
      _
    // Predicated region
    $region6: #{tpu_custom_call.1} parent=1 // pred_check
      _
    $region7: #{tpu_custom_call.1} parent=1 // pred_check_branch
      %14 = sbr.rel (0) target = $region9
    $region8: #{tpu_custom_call.1} parent=1 // pred_region
      _
    $region9: #{tpu_custom_call.1} parent=1 // pred_fallthru
      _
    // Predicated region
    $region10: #{tpu_custom_call.1} parent=1 // pred_check
      _
    $region11: #{tpu_custom_call.1} parent=1 // pred_check_branch
      %16 = sbr.rel (0) target = $region13
    $region12: #{tpu_custom_call.1} parent=1 // pred_region
      _
    $region13: #{tpu_custom_call.1} parent=1 // pred_fallthru
      _
    // Predicated region
    $region14: #{tpu_custom_call.1} parent=1 // pred_check
      _
    $region15: #{tpu_custom_call.1} parent=1 // pred_check_branch
      %18 = sbr.rel (0) target = $region17
    $region16: #{tpu_custom_call.1} parent=1 // pred_region
      _
    $region17: #{tpu_custom_call.1} parent=1 // pred_fallthru
      _
    // Predicated region
    $region18: #{tpu_custom_call.1} parent=1 // pred_check
      _
    $region19: #{tpu_custom_call.1} parent=1 // pred_check_branch
      %20 = sbr.rel (0) target = $region21
    $region20: #{tpu_custom_call.1} parent=1 // pred_region
      _
    $region21: #{tpu_custom_call.1} parent=1 // pred_fallthru
      _
    %v21 = vld [vmem:[%s0] sm:$0xff]
    %v22 = vld [vmem:[%s0 + $0x8] sm:$0xff]
    %v23 = vld [vmem:[%s0 + $0x10] sm:$0xff]
    %v24 = vld [vmem:[%s0 + $0x18] sm:$0xff]
    %v25 = vld [vmem:[%s0 + $0x20] sm:$0xff]
    %v26 = vld [vmem:[%s0 + $0x28] sm:$0xff]
    %v27 = vld [vmem:[%s1] sm:$0xff]
    %v28 = vld [vmem:[%s1 + $0x8] sm:$0xff]
    %v29 = vld [vmem:[%s1 + $0x10] sm:$0xff]
    %v30 = vld [vmem:[%s1 + $0x18] sm:$0xff]
    %v31 = vld [vmem:[%s1 + $0x20] sm:$0xff]
    %v32 = vld [vmem:[%s1 + $0x28] sm:$0xff]
    %v33 = vld [vmem:[%s1 + $0x30] sm:$0xff]
    %v34 = vld [vmem:[%s1 + $0x38] sm:$0xff]
    %v35 = vld [vmem:[%s1 + $0x40] sm:$0xff]
    %v36 = vld [vmem:[%s1 + $0x48] sm:$0xff]
    %v37 = vld [vmem:[%s1 + $0x50] sm:$0xff]
    %v38 = vld [vmem:[%s1 + $0x58] sm:$0xff]
    %v39 = vld [vmem:[%s1 + $0x60] sm:$0xff]
    %v40 = vld [vmem:[%s1 + $0x68] sm:$0xff]
    %v41 = vld [vmem:[%s1 + $0x70] sm:$0xff]
    %v42 = vld [vmem:[%s1 + $0x78] sm:$0xff]
    %v43 = vld [vmem:[%s1 + $0x80] sm:$0xff]
    %v44 = vld [vmem:[%s1 + $0x88] sm:$0xff]
    %v45 = vld [vmem:[%s1 + $0x90] sm:$0xff]
    %v46 = vld [vmem:[%s1 + $0x98] sm:$0xff]
    %v47 = vld [vmem:[%s1 + $0xa0] sm:$0xff]
    %v48 = vld [vmem:[%s1 + $0xa8] sm:$0xff]
    %v49 = vld [vmem:[%s1 + $0xb0] sm:$0xff]
    %v50 = vld [vmem:[%s1 + $0xb8] sm:$0xff]
    %vm51 = vcmask 261120
    %v53 = vsel %vm51, %v21, 0
    %v56 = vsel %vm51, %v22, 0
    %v59 = vsel %vm51, %v23, 0
    %v62 = vsel %vm51, %v24, 0
    %v65 = vsel %vm51, %v25, 0
    %v68 = vsel %vm51, %v26, 0
    %70 = vmatprep.subr.mxu0 0.0
    %71 = vmatpush1.msra.mxu0 0.0
    %72 = vmatprep.subr.mxu0 0.0
    %73 = vmatpush1.msra.mxu0 0.0
    %74 = vmatprep.subr.mxu0 0.0
    %75 = vmatpush1.msra.mxu0 0.0
    %76 = vmatprep.subr.mxu0 0.0
    %77 = vmatpush1.msra.mxu0 0.0
    %78 = vmatprep.subr.mxu0 0.0
    %79 = vmatpush1.msra.mxu0 0.0
    %80 = vmatprep.subr.mxu0 0.0
    %81 = vmatpush1.msra.mxu0 0.0
    %82 = vmatprep.subr.mxu0 0.0
    %83 = vmatpush1.msra.mxu0 0.0
    %84 = vmatprep.subr.mxu0 0.0
    %85 = vmatpush1.msra.mxu0 0.0
    %86 = vmatprep.subr.mxu0 0.0
    %87 = vmatpush1.msra.mxu0 0.0
    %88 = vmatprep.subr.mxu0 0.0
    %89 = vmatpush1.msra.mxu0 0.0
    %90 = vmatprep.subr.mxu0 0.0
    %91 = vmatpush1.msra.mxu0 0.0
    %92 = vmatprep.subr.mxu0 0.0
    %93 = vmatpush1.msra.mxu0 0.0
    %94 = vmatprep.subr.mxu0 %v46
    %95 = vmatpush1.msra.mxu0 %v45
    %96 = vmatprep.subr.mxu0 %v40
    %97 = vmatpush1.msra.mxu0 %v39
    %98 = vmatprep.subr.mxu0 %v34
    %99 = vmatpush1.msra.mxu0 %v33
    %100 = vmatprep.subr.mxu0 %v28
    %101 = vmatpush1.msra.mxu0 %v27
    %102 = vmatprep.subr.mxu0 0.0
    %103 = vmatpush2.msra.mxu0 0.0
    %104 = vmatprep.subr.mxu0 0.0
    %105 = vmatpush2.msra.mxu0 0.0
    %106 = vmatprep.subr.mxu0 0.0
    %107 = vmatpush2.msra.mxu0 0.0
    %108 = vmatprep.subr.mxu0 0.0
    %109 = vmatpush2.msra.mxu0 0.0
    %110 = vmatprep.subr.mxu0 0.0
    %111 = vmatpush2.msra.mxu0 0.0
    %112 = vmatprep.subr.mxu0 0.0
    %113 = vmatpush2.msra.mxu0 0.0
    %114 = vmatprep.subr.mxu0 0.0
    %115 = vmatpush2.msra.mxu0 0.0
    %116 = vmatprep.subr.mxu0 0.0
    %117 = vmatpush2.msra.mxu0 0.0
    %118 = vmatprep.subr.mxu0 0.0
    %119 = vmatpush2.msra.mxu0 0.0
    %120 = vmatprep.subr.mxu0 0.0
    %121 = vmatpush2.msra.mxu0 0.0
    %122 = vmatprep.subr.mxu0 0.0
    %123 = vmatpush2.msra.mxu0 0.0
    %124 = vmatprep.subr.mxu0 0.0
    %125 = vmatpush2.msra.mxu0 0.0
    %126 = vmatprep.subr.mxu0 0.0
    %127 = vmatpush2.msra.mxu0 0.0
    %128 = vmatprep.subr.mxu0 0.0
    %129 = vmatpush2.msra.mxu0 0.0
    %130 = vmatprep.subr.mxu0 0.0
    %131 = vmatpush2.msra.mxu0 0.0
    %132 = vmatprep.subr.mxu0 0.0
    %133 = vmatpush2.msra.mxu0 0.0
    %134 = vmatprep.mubr.f32.mxu0 0.0
    %135 = vmatmul.mubr.f32.gmra.mxu0 %v53
    %v136 = vpop.f32.mrf.mxu0
    %v137 = vadd.f32 0.0, %v136
    %v138 = vpop.f32.mrf.mxu0
    %v139 = vadd.f32 0.0, %v138
    %140 = vmatprep.mubr.f32.mxu0 0.0
    %141 = vmatmul.mubr.f32.gmra.mxu0 %v56
    %v142 = vpop.f32.mrf.mxu0
    %v143 = vadd.f32 0.0, %v142
    %v144 = vpop.f32.mrf.mxu0
    %v145 = vadd.f32 0.0, %v144
    %146 = vmatprep.mubr.f32.mxu0 0.0
    %147 = vmatmul.mubr.f32.gmra.mxu0 %v59
    %v148 = vpop.f32.mrf.mxu0
    %v149 = vpop.f32.mrf.mxu0
    %150 = vmatprep.mubr.f32.mxu0 0.0
    %151 = vmatmul.mubr.f32.gmra.mxu0 %v62
    %v152 = vpop.f32.mrf.mxu0
    %v153 = vpop.f32.mrf.mxu0
    %154 = vmatprep.mubr.f32.mxu0 0.0
    %155 = vmatmul.mubr.f32.gmra.mxu0 %v65
    %v156 = vpop.f32.mrf.mxu0
    %v157 = vpop.f32.mrf.mxu0
    %158 = vmatprep.mubr.f32.mxu0 0.0
    %159 = vmatmul.mubr.f32.gmra.mxu0 %v68
    %v160 = vpop.f32.mrf.mxu0
    %v161 = vpop.f32.mrf.mxu0
    %162 = vdwg.mxu0
    %163 = vmatprep.subr.mxu0 0.0
    %164 = vmatpush1.msra.mxu0 0.0
    %165 = vmatprep.subr.mxu0 0.0
    %166 = vmatpush1.msra.mxu0 0.0
    %167 = vmatprep.subr.mxu0 0.0
    %168 = vmatpush1.msra.mxu0 0.0
    %169 = vmatprep.subr.mxu0 0.0
    %170 = vmatpush1.msra.mxu0 0.0
    %171 = vmatprep.subr.mxu0 0.0
    %172 = vmatpush1.msra.mxu0 0.0
    %173 = vmatprep.subr.mxu0 0.0
    %174 = vmatpush1.msra.mxu0 0.0
    %175 = vmatprep.subr.mxu0 0.0
    %176 = vmatpush1.msra.mxu0 0.0
    %177 = vmatprep.subr.mxu0 0.0
    %178 = vmatpush1.msra.mxu0 0.0
    %179 = vmatprep.subr.mxu0 0.0
    %180 = vmatpush1.msra.mxu0 0.0
    %181 = vmatprep.subr.mxu0 0.0
    %182 = vmatpush1.msra.mxu0 0.0
    %183 = vmatprep.subr.mxu0 0.0
    %184 = vmatpush1.msra.mxu0 0.0
    %185 = vmatprep.subr.mxu0 0.0
    %186 = vmatpush1.msra.mxu0 0.0
    %187 = vmatprep.subr.mxu0 %v48
    %188 = vmatpush1.msra.mxu0 %v47
    %189 = vmatprep.subr.mxu0 %v42
    %190 = vmatpush1.msra.mxu0 %v41
    %191 = vmatprep.subr.mxu0 %v36
    %192 = vmatpush1.msra.mxu0 %v35
    %193 = vmatprep.subr.mxu0 %v30
    %194 = vmatpush1.msra.mxu0 %v29
    %195 = vmatprep.subr.mxu0 0.0
    %196 = vmatpush2.msra.mxu0 0.0
    %197 = vmatprep.subr.mxu0 0.0
    %198 = vmatpush2.msra.mxu0 0.0
    %199 = vmatprep.subr.mxu0 0.0
    %200 = vmatpush2.msra.mxu0 0.0
    %201 = vmatprep.subr.mxu0 0.0
    %202 = vmatpush2.msra.mxu0 0.0
    %203 = vmatprep.subr.mxu0 0.0
    %204 = vmatpush2.msra.mxu0 0.0
    %205 = vmatprep.subr.mxu0 0.0
    %206 = vmatpush2.msra.mxu0 0.0
    %207 = vmatprep.subr.mxu0 0.0
    %208 = vmatpush2.msra.mxu0 0.0
    %209 = vmatprep.subr.mxu0 0.0
    %210 = vmatpush2.msra.mxu0 0.0
    %211 = vmatprep.subr.mxu0 0.0
    %212 = vmatpush2.msra.mxu0 0.0
    %213 = vmatprep.subr.mxu0 0.0
    %214 = vmatpush2.msra.mxu0 0.0
    %215 = vmatprep.subr.mxu0 0.0
    %216 = vmatpush2.msra.mxu0 0.0
    %217 = vmatprep.subr.mxu0 0.0
    %218 = vmatpush2.msra.mxu0 0.0
    %219 = vmatprep.subr.mxu0 0.0
    %220 = vmatpush2.msra.mxu0 0.0
    %221 = vmatprep.subr.mxu0 0.0
    %222 = vmatpush2.msra.mxu0 0.0
    %223 = vmatprep.subr.mxu0 0.0
    %224 = vmatpush2.msra.mxu0 0.0
    %225 = vmatprep.subr.mxu0 0.0
    %226 = vmatpush2.msra.mxu0 0.0
    %227 = vmatprep.mubr.f32.mxu0 0.0
    %228 = vmatmul.mubr.f32.gmra.mxu0 %v53
    %v229 = vpop.f32.mrf.mxu0
    %v230 = vpop.f32.mrf.mxu0
    %231 = vmatprep.mubr.f32.mxu0 0.0
    %232 = vmatmul.mubr.f32.gmra.mxu0 %v56
    %v233 = vpop.f32.mrf.mxu0
    %v234 = vpop.f32.mrf.mxu0
    %235 = vmatprep.mubr.f32.mxu0 0.0
    %236 = vmatmul.mubr.f32.gmra.mxu0 %v59
    %v237 = vpop.f32.mrf.mxu0
    %v238 = vadd.f32 0.0, %v237
    %v239 = vpop.f32.mrf.mxu0
    %v240 = vadd.f32 0.0, %v239
    %241 = vmatprep.mubr.f32.mxu0 0.0
    %242 = vmatmul.mubr.f32.gmra.mxu0 %v62
    %v243 = vpop.f32.mrf.mxu0
    %v244 = vadd.f32 0.0, %v243
    %v245 = vpop.f32.mrf.mxu0
    %v246 = vadd.f32 0.0, %v245
    %247 = vmatprep.mubr.f32.mxu0 0.0
    %248 = vmatmul.mubr.f32.gmra.mxu0 %v65
    %v249 = vpop.f32.mrf.mxu0
    %v250 = vpop.f32.mrf.mxu0
    %251 = vmatprep.mubr.f32.mxu0 0.0
    %252 = vmatmul.mubr.f32.gmra.mxu0 %v68
    %v253 = vpop.f32.mrf.mxu0
    %v254 = vpop.f32.mrf.mxu0
    %255 = vdwg.mxu0
    %256 = vmatprep.subr.mxu0 0.0
    %257 = vmatpush1.msra.mxu0 0.0
    %258 = vmatprep.subr.mxu0 0.0
    %259 = vmatpush1.msra.mxu0 0.0
    %260 = vmatprep.subr.mxu0 0.0
    %261 = vmatpush1.msra.mxu0 0.0
    %262 = vmatprep.subr.mxu0 0.0
    %263 = vmatpush1.msra.mxu0 0.0
    %264 = vmatprep.subr.mxu0 0.0
    %265 = vmatpush1.msra.mxu0 0.0
    %266 = vmatprep.subr.mxu0 0.0
    %267 = vmatpush1.msra.mxu0 0.0
    %268 = vmatprep.subr.mxu0 0.0
    %269 = vmatpush1.msra.mxu0 0.0
    %270 = vmatprep.subr.mxu0 0.0
    %271 = vmatpush1.msra.mxu0 0.0
    %272 = vmatprep.subr.mxu0 0.0
    %273 = vmatpush1.msra.mxu0 0.0
    %274 = vmatprep.subr.mxu0 0.0
    %275 = vmatpush1.msra.mxu0 0.0
    %276 = vmatprep.subr.mxu0 0.0
    %277 = vmatpush1.msra.mxu0 0.0
    %278 = vmatprep.subr.mxu0 0.0
    %279 = vmatpush1.msra.mxu0 0.0
    %280 = vmatprep.subr.mxu0 %v50
    %281 = vmatpush1.msra.mxu0 %v49
    %282 = vmatprep.subr.mxu0 %v44
    %283 = vmatpush1.msra.mxu0 %v43
    %284 = vmatprep.subr.mxu0 %v38
    %285 = vmatpush1.msra.mxu0 %v37
    %286 = vmatprep.subr.mxu0 %v32
    %287 = vmatpush1.msra.mxu0 %v31
    %288 = vmatprep.subr.mxu0 0.0
    %289 = vmatpush2.msra.mxu0 0.0
    %290 = vmatprep.subr.mxu0 0.0
    %291 = vmatpush2.msra.mxu0 0.0
    %292 = vmatprep.subr.mxu0 0.0
    %293 = vmatpush2.msra.mxu0 0.0
    %294 = vmatprep.subr.mxu0 0.0
    %295 = vmatpush2.msra.mxu0 0.0
    %296 = vmatprep.subr.mxu0 0.0
    %297 = vmatpush2.msra.mxu0 0.0
    %298 = vmatprep.subr.mxu0 0.0
    %299 = vmatpush2.msra.mxu0 0.0
    %300 = vmatprep.subr.mxu0 0.0
    %301 = vmatpush2.msra.mxu0 0.0
    %302 = vmatprep.subr.mxu0 0.0
    %303 = vmatpush2.msra.mxu0 0.0
    %304 = vmatprep.subr.mxu0 0.0
    %305 = vmatpush2.msra.mxu0 0.0
    %306 = vmatprep.subr.mxu0 0.0
    %307 = vmatpush2.msra.mxu0 0.0
    %308 = vmatprep.subr.mxu0 0.0
    %309 = vmatpush2.msra.mxu0 0.0
    %310 = vmatprep.subr.mxu0 0.0
    %311 = vmatpush2.msra.mxu0 0.0
    %312 = vmatprep.subr.mxu0 0.0
    %313 = vmatpush2.msra.mxu0 0.0
    %314 = vmatprep.subr.mxu0 0.0
    %315 = vmatpush2.msra.mxu0 0.0
    %316 = vmatprep.subr.mxu0 0.0
    %317 = vmatpush2.msra.mxu0 0.0
    %318 = vmatprep.subr.mxu0 0.0
    %319 = vmatpush2.msra.mxu0 0.0
    %320 = vmatprep.mubr.f32.mxu0 0.0
    %321 = vmatmul.mubr.f32.gmra.mxu0 %v53
    %v322 = vpop.f32.mrf.mxu0
    %v323 = vpop.f32.mrf.mxu0
    %324 = vmatprep.mubr.f32.mxu0 0.0
    %325 = vmatmul.mubr.f32.gmra.mxu0 %v56
    %v326 = vpop.f32.mrf.mxu0
    %v327 = vpop.f32.mrf.mxu0
    %328 = vmatprep.mubr.f32.mxu0 0.0
    %329 = vmatmul.mubr.f32.gmra.mxu0 %v59
    %v330 = vpop.f32.mrf.mxu0
    %v331 = vpop.f32.mrf.mxu0
    %332 = vmatprep.mubr.f32.mxu0 0.0
    %333 = vmatmul.mubr.f32.gmra.mxu0 %v62
    %v334 = vpop.f32.mrf.mxu0
    %v335 = vpop.f32.mrf.mxu0
    %336 = vmatprep.mubr.f32.mxu0 0.0
    %337 = vmatmul.mubr.f32.gmra.mxu0 %v65
    %v338 = vpop.f32.mrf.mxu0
    %v339 = vadd.f32 0.0, %v338
    %v340 = vpop.f32.mrf.mxu0
    %v341 = vadd.f32 0.0, %v340
    %342 = vmatprep.mubr.f32.mxu0 0.0
    %343 = vmatmul.mubr.f32.gmra.mxu0 %v68
    %v344 = vpop.f32.mrf.mxu0
    %v345 = vadd.f32 0.0, %v344
    %v346 = vpop.f32.mrf.mxu0
    %v347 = vadd.f32 0.0, %v346
    %348 = vdwg.mxu0
    %v349 = vld [vmem:[%s2] sm:$0x3]
    %v351 = vlaneseq
    %v352 = vshrl.u32 %v351, 7
    %v353 = vsub.s32 0, %v352
    %v354 = vrot.slane %v349, %v353
    %v355 = vlaneseq
    %v356 = vshrl.u32 %v355, 7
    %v357 = vsub.s32 1, %v356
    %v358 = vrot.slane %v349, %v357
    %v361 = vadd.f32 %v137, %v354
    %v362 = vadd.f32 %v139, %v358
    %v363 = vadd.f32 %v143, %v354
    %v364 = vadd.f32 %v145, %v358
    %v365 = vld [vmem:[%s2 + $0x2] sm:$0x3]
    %v367 = vlaneseq
    %v368 = vshrl.u32 %v367, 7
    %v369 = vsub.s32 0, %v368
    %v370 = vrot.slane %v365, %v369
    %v371 = vlaneseq
    %v372 = vshrl.u32 %v371, 7
    %v373 = vsub.s32 1, %v372
    %v374 = vrot.slane %v365, %v373
    %v377 = vadd.f32 %v238, %v370
    %v378 = vadd.f32 %v240, %v374
    %v379 = vadd.f32 %v244, %v370
    %v380 = vadd.f32 %v246, %v374
    %v381 = vld [vmem:[%s2 + $0x4] sm:$0x3]
    %v383 = vlaneseq
    %v384 = vshrl.u32 %v383, 7
    %v385 = vsub.s32 0, %v384
    %v386 = vrot.slane %v381, %v385
    %v387 = vlaneseq
    %v388 = vshrl.u32 %v387, 7
    %v389 = vsub.s32 1, %v388
    %v390 = vrot.slane %v381, %v389
    %v393 = vadd.f32 %v339, %v386
    %v394 = vadd.f32 %v341, %v390
    %v395 = vadd.f32 %v345, %v386
    %v396 = vadd.f32 %v347, %v390
    %vm397 = vcmask 523264
    %v399 = vsel %vm397, %v361, 0
    %v402 = vsel %vm397, %v377, 0
    %404 = vmatprep.subr.mxu0 0.0
    %405 = vmatpush1.xpose.msra.mxu0 0.0
    %406 = vmatprep.subr.mxu0 0.0
    %407 = vmatpush1.xpose.msra.mxu0 0.0
    %408 = vmatprep.subr.mxu0 0.0
    %409 = vmatpush1.xpose.msra.mxu0 0.0
    %410 = vmatprep.subr.mxu0 0.0
    %411 = vmatpush1.xpose.msra.mxu0 0.0
    %412 = vmatprep.subr.mxu0 0.0
    %413 = vmatpush1.xpose.msra.mxu0 0.0
    %414 = vmatprep.subr.mxu0 0.0
    %415 = vmatpush1.xpose.msra.mxu0 0.0
    %416 = vmatprep.subr.mxu0 0.0
    %417 = vmatpush1.xpose.msra.mxu0 0.0
    %418 = vmatprep.subr.mxu0 0.0
    %419 = vmatpush1.xpose.msra.mxu0 0.0
    %420 = vmatprep.subr.mxu0 0.0
    %421 = vmatpush1.xpose.msra.mxu0 0.0
    %422 = vmatprep.subr.mxu0 0.0
    %423 = vmatpush1.xpose.msra.mxu0 0.0
    %424 = vmatprep.subr.mxu0 0.0
    %425 = vmatpush1.xpose.msra.mxu0 0.0
    %426 = vmatprep.subr.mxu0 0.0
    %427 = vmatpush1.xpose.msra.mxu0 0.0
    %428 = vmatprep.subr.mxu0 0.0
    %429 = vmatpush1.xpose.msra.mxu0 0.0
    %430 = vmatprep.subr.mxu0 0.0
    %431 = vmatpush1.xpose.msra.mxu0 0.0
    %432 = vmatprep.subr.mxu0 0.0
    %433 = vmatpush1.xpose.msra.mxu0 0.0
    %434 = vmatprep.subr.mxu0 0.0
    %435 = vmatpush1.xpose.msra.mxu0 %v402
    %436 = vmatprep.subr.mxu0 0.0
    %437 = vmatpush2.xpose.msra.mxu0 0.0
    %438 = vmatprep.subr.mxu0 0.0
    %439 = vmatpush2.xpose.msra.mxu0 0.0
    %440 = vmatprep.subr.mxu0 0.0
    %441 = vmatpush2.xpose.msra.mxu0 0.0
    %442 = vmatprep.subr.mxu0 0.0
    %443 = vmatpush2.xpose.msra.mxu0 0.0
    %444 = vmatprep.subr.mxu0 0.0
    %445 = vmatpush2.xpose.msra.mxu0 0.0
    %446 = vmatprep.subr.mxu0 0.0
    %447 = vmatpush2.xpose.msra.mxu0 0.0
    %448 = vmatprep.subr.mxu0 0.0
    %449 = vmatpush2.xpose.msra.mxu0 0.0
    %450 = vmatprep.subr.mxu0 0.0
    %451 = vmatpush2.xpose.msra.mxu0 0.0
    %452 = vmatprep.subr.mxu0 0.0
    %453 = vmatpush2.xpose.msra.mxu0 0.0
    %454 = vmatprep.subr.mxu0 0.0
    %455 = vmatpush2.xpose.msra.mxu0 0.0
    %456 = vmatprep.subr.mxu0 0.0
    %457 = vmatpush2.xpose.msra.mxu0 0.0
    %458 = vmatprep.subr.mxu0 0.0
    %459 = vmatpush2.xpose.msra.mxu0 0.0
    %460 = vmatprep.subr.mxu0 0.0
    %461 = vmatpush2.xpose.msra.mxu0 0.0
    %462 = vmatprep.subr.mxu0 0.0
    %463 = vmatpush2.xpose.msra.mxu0 0.0
    %464 = vmatprep.subr.mxu0 0.0
    %465 = vmatpush2.xpose.msra.mxu0 0.0
    %466 = vmatprep.subr.mxu0 0.0
    %467 = vmatpush2.xpose.msra.mxu0 0.0
    %468 = vmatprep.mubr.f32.mxu0 0.0
    %469 = vmatmul.mubr.f32.gmra.mxu0 %v399
    %v470 = vpop.f32.mrf.mxu0
    %v471 = vadd.f32 0.0, %v470
    %v472 = vpop.f32.mrf.mxu0
    %473 = vdwg.mxu0
    %v475 = vsel %vm397, %v363, 0
    %v478 = vsel %vm397, %v379, 0
    %480 = vmatprep.subr.mxu0 0.0
    %481 = vmatpush1.xpose.msra.mxu0 0.0
    %482 = vmatprep.subr.mxu0 0.0
    %483 = vmatpush1.xpose.msra.mxu0 0.0
    %484 = vmatprep.subr.mxu0 0.0
    %485 = vmatpush1.xpose.msra.mxu0 0.0
    %486 = vmatprep.subr.mxu0 0.0
    %487 = vmatpush1.xpose.msra.mxu0 0.0
    %488 = vmatprep.subr.mxu0 0.0
    %489 = vmatpush1.xpose.msra.mxu0 0.0
    %490 = vmatprep.subr.mxu0 0.0
    %491 = vmatpush1.xpose.msra.mxu0 0.0
    %492 = vmatprep.subr.mxu0 0.0
    %493 = vmatpush1.xpose.msra.mxu0 0.0
    %494 = vmatprep.subr.mxu0 0.0
    %495 = vmatpush1.xpose.msra.mxu0 0.0
    %496 = vmatprep.subr.mxu0 0.0
    %497 = vmatpush1.xpose.msra.mxu0 0.0
    %498 = vmatprep.subr.mxu0 0.0
    %499 = vmatpush1.xpose.msra.mxu0 0.0
    %500 = vmatprep.subr.mxu0 0.0
    %501 = vmatpush1.xpose.msra.mxu0 0.0
    %502 = vmatprep.subr.mxu0 0.0
    %503 = vmatpush1.xpose.msra.mxu0 0.0
    %504 = vmatprep.subr.mxu0 0.0
    %505 = vmatpush1.xpose.msra.mxu0 0.0
    %506 = vmatprep.subr.mxu0 0.0
    %507 = vmatpush1.xpose.msra.mxu0 0.0
    %508 = vmatprep.subr.mxu0 0.0
    %509 = vmatpush1.xpose.msra.mxu0 0.0
    %510 = vmatprep.subr.mxu0 0.0
    %511 = vmatpush1.xpose.msra.mxu0 %v478
    %512 = vmatprep.subr.mxu0 0.0
    %513 = vmatpush2.xpose.msra.mxu0 0.0
    %514 = vmatprep.subr.mxu0 0.0
    %515 = vmatpush2.xpose.msra.mxu0 0.0
    %516 = vmatprep.subr.mxu0 0.0
    %517 = vmatpush2.xpose.msra.mxu0 0.0
    %518 = vmatprep.subr.mxu0 0.0
    %519 = vmatpush2.xpose.msra.mxu0 0.0
    %520 = vmatprep.subr.mxu0 0.0
    %521 = vmatpush2.xpose.msra.mxu0 0.0
    %522 = vmatprep.subr.mxu0 0.0
    %523 = vmatpush2.xpose.msra.mxu0 0.0
    %524 = vmatprep.subr.mxu0 0.0
    %525 = vmatpush2.xpose.msra.mxu0 0.0
    %526 = vmatprep.subr.mxu0 0.0
    %527 = vmatpush2.xpose.msra.mxu0 0.0
    %528 = vmatprep.subr.mxu0 0.0
    %529 = vmatpush2.xpose.msra.mxu0 0.0
    %530 = vmatprep.subr.mxu0 0.0
    %531 = vmatpush2.xpose.msra.mxu0 0.0
    %532 = vmatprep.subr.mxu0 0.0
    %533 = vmatpush2.xpose.msra.mxu0 0.0
    %534 = vmatprep.subr.mxu0 0.0
    %535 = vmatpush2.xpose.msra.mxu0 0.0
    %536 = vmatprep.subr.mxu0 0.0
    %537 = vmatpush2.xpose.msra.mxu0 0.0
    %538 = vmatprep.subr.mxu0 0.0
    %539 = vmatpush2.xpose.msra.mxu0 0.0
    %540 = vmatprep.subr.mxu0 0.0
    %541 = vmatpush2.xpose.msra.mxu0 0.0
    %542 = vmatprep.subr.mxu0 0.0
    %543 = vmatpush2.xpose.msra.mxu0 0.0
    %544 = vmatprep.mubr.f32.mxu0 0.0
    %545 = vmatmul.mubr.f32.gmra.mxu0 %v475
    %v546 = vpop.f32.mrf.mxu0
    %v547 = vadd.f32 0.0, %v546
    %v548 = vpop.f32.mrf.mxu0
    %549 = vdwg.mxu0
    %v550 = vmul.f32 %v471, 0.125
    %v551 = vmul.f32 %v547, 0.125
    %vm552 = vcmask 64512
    %v553 = vsel %vm552, %v550, -inf
    %554 = vmax.xlane.f32.xlu0 %v553
    %v555 = vpop.xlane.xlu0 %554
    %v556 = vsel %vm552, %v551, -inf
    %557 = vmax.xlane.f32.xlu0 %v556
    %v558 = vpop.xlane.xlu0 %557
    %v559 = vsub.f32 %v550, %v555
    %v560 = vsub.f32 %v551, %v558
    %v561 = vmul.f32 %v559, 1.442695
    %v562 = vpow.pop %v561
    %v563 = vmul.f32 %v560, 1.442695
    %v564 = vpow.pop %v563
    %v565 = vsel %vm552, %v562, 0.0
    %566 = vadd.xlane.f32.xlu0 %v565
    %v567 = vpop.xlane.xlu0 %566
    %v568 = vsel %vm552, %v564, 0.0
    %569 = vadd.xlane.f32.xlu0 %v568
    %v570 = vpop.xlane.xlu0 %569
    %v571 = vrcp.pop %v567
    %v572 = vrcp.pop %v570
    %v573 = vmul.f32 %v562, %v571
    %v574 = vmul.f32 %v564, %v572
    %v576 = vsel %vm552, %v573, 0
    %578 = vmatprep.subr.mxu0 0.0
    %579 = vmatpush1.msra.mxu0 0.0
    %580 = vmatprep.subr.mxu0 0.0
    %581 = vmatpush1.msra.mxu0 0.0
    %582 = vmatprep.subr.mxu0 0.0
    %583 = vmatpush1.msra.mxu0 0.0
    %584 = vmatprep.subr.mxu0 0.0
    %585 = vmatpush1.msra.mxu0 0.0
    %586 = vmatprep.subr.mxu0 0.0
    %587 = vmatpush1.msra.mxu0 0.0
    %588 = vmatprep.subr.mxu0 0.0
    %589 = vmatpush1.msra.mxu0 0.0
    %590 = vmatprep.subr.mxu0 0.0
    %591 = vmatpush1.msra.mxu0 0.0
    %592 = vmatprep.subr.mxu0 0.0
    %593 = vmatpush1.msra.mxu0 0.0
    %594 = vmatprep.subr.mxu0 0.0
    %595 = vmatpush1.msra.mxu0 0.0
    %596 = vmatprep.subr.mxu0 0.0
    %597 = vmatpush1.msra.mxu0 0.0
    %598 = vmatprep.subr.mxu0 0.0
    %599 = vmatpush1.msra.mxu0 0.0
    %600 = vmatprep.subr.mxu0 0.0
    %601 = vmatpush1.msra.mxu0 0.0
    %602 = vmatprep.subr.mxu0 0.0
    %603 = vmatpush1.msra.mxu0 0.0
    %604 = vmatprep.subr.mxu0 0.0
    %605 = vmatpush1.msra.mxu0 0.0
    %606 = vmatprep.subr.mxu0 0.0
    %607 = vmatpush1.msra.mxu0 0.0
    %608 = vmatprep.subr.mxu0 0.0
    %609 = vmatpush1.msra.mxu0 %v393
    %610 = vmatprep.subr.mxu0 0.0
    %611 = vmatpush2.msra.mxu0 0.0
    %612 = vmatprep.subr.mxu0 0.0
    %613 = vmatpush2.msra.mxu0 0.0
    %614 = vmatprep.subr.mxu0 0.0
    %615 = vmatpush2.msra.mxu0 0.0
    %616 = vmatprep.subr.mxu0 0.0
    %617 = vmatpush2.msra.mxu0 0.0
    %618 = vmatprep.subr.mxu0 0.0
    %619 = vmatpush2.msra.mxu0 0.0
    %620 = vmatprep.subr.mxu0 0.0
    %621 = vmatpush2.msra.mxu0 0.0
    %622 = vmatprep.subr.mxu0 0.0
    %623 = vmatpush2.msra.mxu0 0.0
    %624 = vmatprep.subr.mxu0 0.0
    %625 = vmatpush2.msra.mxu0 0.0
    %626 = vmatprep.subr.mxu0 0.0
    %627 = vmatpush2.msra.mxu0 0.0
    %628 = vmatprep.subr.mxu0 0.0
    %629 = vmatpush2.msra.mxu0 0.0
    %630 = vmatprep.subr.mxu0 0.0
    %631 = vmatpush2.msra.mxu0 0.0
    %632 = vmatprep.subr.mxu0 0.0
    %633 = vmatpush2.msra.mxu0 0.0
    %634 = vmatprep.subr.mxu0 0.0
    %635 = vmatpush2.msra.mxu0 0.0
    %636 = vmatprep.subr.mxu0 0.0
    %637 = vmatpush2.msra.mxu0 0.0
    %638 = vmatprep.subr.mxu0 0.0
    %639 = vmatpush2.msra.mxu0 0.0
    %640 = vmatprep.subr.mxu0 0.0
    %641 = vmatpush2.msra.mxu0 0.0
    %642 = vmatprep.mubr.f32.mxu0 0.0
    %643 = vmatmul.mubr.f32.gmra.mxu0 %v576
    %v644 = vpop.f32.mrf.mxu0
    %v645 = vadd.f32 0.0, %v644
    %v646 = vpop.f32.mrf.mxu0
    %647 = vdwg.mxu0
    %v649 = vsel %vm552, %v574, 0
    %651 = vmatprep.subr.mxu0 0.0
    %652 = vmatpush1.msra.mxu0 0.0
    %653 = vmatprep.subr.mxu0 0.0
    %654 = vmatpush1.msra.mxu0 0.0
    %655 = vmatprep.subr.mxu0 0.0
    %656 = vmatpush1.msra.mxu0 0.0
    %657 = vmatprep.subr.mxu0 0.0
    %658 = vmatpush1.msra.mxu0 0.0
    %659 = vmatprep.subr.mxu0 0.0
    %660 = vmatpush1.msra.mxu0 0.0
    %661 = vmatprep.subr.mxu0 0.0
    %662 = vmatpush1.msra.mxu0 0.0
    %663 = vmatprep.subr.mxu0 0.0
    %664 = vmatpush1.msra.mxu0 0.0
    %665 = vmatprep.subr.mxu0 0.0
    %666 = vmatpush1.msra.mxu0 0.0
    %667 = vmatprep.subr.mxu0 0.0
    %668 = vmatpush1.msra.mxu0 0.0
    %669 = vmatprep.subr.mxu0 0.0
    %670 = vmatpush1.msra.mxu0 0.0
    %671 = vmatprep.subr.mxu0 0.0
    %672 = vmatpush1.msra.mxu0 0.0
    %673 = vmatprep.subr.mxu0 0.0
    %674 = vmatpush1.msra.mxu0 0.0
    %675 = vmatprep.subr.mxu0 0.0
    %676 = vmatpush1.msra.mxu0 0.0
    %677 = vmatprep.subr.mxu0 0.0
    %678 = vmatpush1.msra.mxu0 0.0
    %679 = vmatprep.subr.mxu0 0.0
    %680 = vmatpush1.msra.mxu0 0.0
    %681 = vmatprep.subr.mxu0 0.0
    %682 = vmatpush1.msra.mxu0 %v395
    %683 = vmatprep.subr.mxu0 0.0
    %684 = vmatpush2.msra.mxu0 0.0
    %685 = vmatprep.subr.mxu0 0.0
    %686 = vmatpush2.msra.mxu0 0.0
    %687 = vmatprep.subr.mxu0 0.0
    %688 = vmatpush2.msra.mxu0 0.0
    %689 = vmatprep.subr.mxu0 0.0
    %690 = vmatpush2.msra.mxu0 0.0
    %691 = vmatprep.subr.mxu0 0.0
    %692 = vmatpush2.msra.mxu0 0.0
    %693 = vmatprep.subr.mxu0 0.0
    %694 = vmatpush2.msra.mxu0 0.0
    %695 = vmatprep.subr.mxu0 0.0
    %696 = vmatpush2.msra.mxu0 0.0
    %697 = vmatprep.subr.mxu0 0.0
    %698 = vmatpush2.msra.mxu0 0.0
    %699 = vmatprep.subr.mxu0 0.0
    %700 = vmatpush2.msra.mxu0 0.0
    %701 = vmatprep.subr.mxu0 0.0
    %702 = vmatpush2.msra.mxu0 0.0
    %703 = vmatprep.subr.mxu0 0.0
    %704 = vmatpush2.msra.mxu0 0.0
    %705 = vmatprep.subr.mxu0 0.0
    %706 = vmatpush2.msra.mxu0 0.0
    %707 = vmatprep.subr.mxu0 0.0
    %708 = vmatpush2.msra.mxu0 0.0
    %709 = vmatprep.subr.mxu0 0.0
    %710 = vmatpush2.msra.mxu0 0.0
    %711 = vmatprep.subr.mxu0 0.0
    %712 = vmatpush2.msra.mxu0 0.0
    %713 = vmatprep.subr.mxu0 0.0
    %714 = vmatpush2.msra.mxu0 0.0
    %715 = vmatprep.mubr.f32.mxu0 0.0
    %716 = vmatmul.mubr.f32.gmra.mxu0 %v649
    %v717 = vpop.f32.mrf.mxu0
    %v718 = vadd.f32 0.0, %v717
    %v719 = vpop.f32.mrf.mxu0
    %720 = vdwg.mxu0
    %721 = vrot.lane.b32.xlu0 %v361, 64
    %v722 = vpop.permute.xlu0 %721
    %723 = vrot.lane.b32.xlu0 %v377, 64
    %v724 = vpop.permute.xlu0 %723
    %v725 = vsel %vm397, %v722, 0
    %v727 = vsel %vm397, %v724, 0
    %729 = vmatprep.subr.mxu0 0.0
    %730 = vmatpush1.xpose.msra.mxu0 0.0
    %731 = vmatprep.subr.mxu0 0.0
    %732 = vmatpush1.xpose.msra.mxu0 0.0
    %733 = vmatprep.subr.mxu0 0.0
    %734 = vmatpush1.xpose.msra.mxu0 0.0
    %735 = vmatprep.subr.mxu0 0.0
    %736 = vmatpush1.xpose.msra.mxu0 0.0
    %737 = vmatprep.subr.mxu0 0.0
    %738 = vmatpush1.xpose.msra.mxu0 0.0
    %739 = vmatprep.subr.mxu0 0.0
    %740 = vmatpush1.xpose.msra.mxu0 0.0
    %741 = vmatprep.subr.mxu0 0.0
    %742 = vmatpush1.xpose.msra.mxu0 0.0
    %743 = vmatprep.subr.mxu0 0.0
    %744 = vmatpush1.xpose.msra.mxu0 0.0
    %745 = vmatprep.subr.mxu0 0.0
    %746 = vmatpush1.xpose.msra.mxu0 0.0
    %747 = vmatprep.subr.mxu0 0.0
    %748 = vmatpush1.xpose.msra.mxu0 0.0
    %749 = vmatprep.subr.mxu0 0.0
    %750 = vmatpush1.xpose.msra.mxu0 0.0
    %751 = vmatprep.subr.mxu0 0.0
    %752 = vmatpush1.xpose.msra.mxu0 0.0
    %753 = vmatprep.subr.mxu0 0.0
    %754 = vmatpush1.xpose.msra.mxu0 0.0
    %755 = vmatprep.subr.mxu0 0.0
    %756 = vmatpush1.xpose.msra.mxu0 0.0
    %757 = vmatprep.subr.mxu0 0.0
    %758 = vmatpush1.xpose.msra.mxu0 0.0
    %759 = vmatprep.subr.mxu0 0.0
    %760 = vmatpush1.xpose.msra.mxu0 %v727
    %761 = vmatprep.subr.mxu0 0.0
    %762 = vmatpush2.xpose.msra.mxu0 0.0
    %763 = vmatprep.subr.mxu0 0.0
    %764 = vmatpush2.xpose.msra.mxu0 0.0
    %765 = vmatprep.subr.mxu0 0.0
    %766 = vmatpush2.xpose.msra.mxu0 0.0
    %767 = vmatprep.subr.mxu0 0.0
    %768 = vmatpush2.xpose.msra.mxu0 0.0
    %769 = vmatprep.subr.mxu0 0.0
    %770 = vmatpush2.xpose.msra.mxu0 0.0
    %771 = vmatprep.subr.mxu0 0.0
    %772 = vmatpush2.xpose.msra.mxu0 0.0
    %773 = vmatprep.subr.mxu0 0.0
    %774 = vmatpush2.xpose.msra.mxu0 0.0
    %775 = vmatprep.subr.mxu0 0.0
    %776 = vmatpush2.xpose.msra.mxu0 0.0
    %777 = vmatprep.subr.mxu0 0.0
    %778 = vmatpush2.xpose.msra.mxu0 0.0
    %779 = vmatprep.subr.mxu0 0.0
    %780 = vmatpush2.xpose.msra.mxu0 0.0
    %781 = vmatprep.subr.mxu0 0.0
    %782 = vmatpush2.xpose.msra.mxu0 0.0
    %783 = vmatprep.subr.mxu0 0.0
    %784 = vmatpush2.xpose.msra.mxu0 0.0
    %785 = vmatprep.subr.mxu0 0.0
    %786 = vmatpush2.xpose.msra.mxu0 0.0
    %787 = vmatprep.subr.mxu0 0.0
    %788 = vmatpush2.xpose.msra.mxu0 0.0
    %789 = vmatprep.subr.mxu0 0.0
    %790 = vmatpush2.xpose.msra.mxu0 0.0
    %791 = vmatprep.subr.mxu0 0.0
    %792 = vmatpush2.xpose.msra.mxu0 0.0
    %793 = vmatprep.mubr.f32.mxu0 0.0
    %794 = vmatmul.mubr.f32.gmra.mxu0 %v725
    %v795 = vpop.f32.mrf.mxu0
    %v796 = vadd.f32 0.0, %v795
    %v797 = vpop.f32.mrf.mxu0
    %798 = vdwg.mxu0
    %799 = vrot.lane.b32.xlu0 %v363, 64
    %v800 = vpop.permute.xlu0 %799
    %801 = vrot.lane.b32.xlu0 %v379, 64
    %v802 = vpop.permute.xlu0 %801
    %v803 = vsel %vm397, %v800, 0
    %v805 = vsel %vm397, %v802, 0
    %807 = vmatprep.subr.mxu0 0.0
    %808 = vmatpush1.xpose.msra.mxu0 0.0
    %809 = vmatprep.subr.mxu0 0.0
    %810 = vmatpush1.xpose.msra.mxu0 0.0
    %811 = vmatprep.subr.mxu0 0.0
    %812 = vmatpush1.xpose.msra.mxu0 0.0
    %813 = vmatprep.subr.mxu0 0.0
    %814 = vmatpush1.xpose.msra.mxu0 0.0
    %815 = vmatprep.subr.mxu0 0.0
    %816 = vmatpush1.xpose.msra.mxu0 0.0
    %817 = vmatprep.subr.mxu0 0.0
    %818 = vmatpush1.xpose.msra.mxu0 0.0
    %819 = vmatprep.subr.mxu0 0.0
    %820 = vmatpush1.xpose.msra.mxu0 0.0
    %821 = vmatprep.subr.mxu0 0.0
    %822 = vmatpush1.xpose.msra.mxu0 0.0
    %823 = vmatprep.subr.mxu0 0.0
    %824 = vmatpush1.xpose.msra.mxu0 0.0
    %825 = vmatprep.subr.mxu0 0.0
    %826 = vmatpush1.xpose.msra.mxu0 0.0
    %827 = vmatprep.subr.mxu0 0.0
    %828 = vmatpush1.xpose.msra.mxu0 0.0
    %829 = vmatprep.subr.mxu0 0.0
    %830 = vmatpush1.xpose.msra.mxu0 0.0
    %831 = vmatprep.subr.mxu0 0.0
    %832 = vmatpush1.xpose.msra.mxu0 0.0
    %833 = vmatprep.subr.mxu0 0.0
    %834 = vmatpush1.xpose.msra.mxu0 0.0
    %835 = vmatprep.subr.mxu0 0.0
    %836 = vmatpush1.xpose.msra.mxu0 0.0
    %837 = vmatprep.subr.mxu0 0.0
    %838 = vmatpush1.xpose.msra.mxu0 %v805
    %839 = vmatprep.subr.mxu0 0.0
    %840 = vmatpush2.xpose.msra.mxu0 0.0
    %841 = vmatprep.subr.mxu0 0.0
    %842 = vmatpush2.xpose.msra.mxu0 0.0
    %843 = vmatprep.subr.mxu0 0.0
    %844 = vmatpush2.xpose.msra.mxu0 0.0
    %845 = vmatprep.subr.mxu0 0.0
    %846 = vmatpush2.xpose.msra.mxu0 0.0
    %847 = vmatprep.subr.mxu0 0.0
    %848 = vmatpush2.xpose.msra.mxu0 0.0
    %849 = vmatprep.subr.mxu0 0.0
    %850 = vmatpush2.xpose.msra.mxu0 0.0
    %851 = vmatprep.subr.mxu0 0.0
    %852 = vmatpush2.xpose.msra.mxu0 0.0
    %853 = vmatprep.subr.mxu0 0.0
    %854 = vmatpush2.xpose.msra.mxu0 0.0
    %855 = vmatprep.subr.mxu0 0.0
    %856 = vmatpush2.xpose.msra.mxu0 0.0
    %857 = vmatprep.subr.mxu0 0.0
    %858 = vmatpush2.xpose.msra.mxu0 0.0
    %859 = vmatprep.subr.mxu0 0.0
    %860 = vmatpush2.xpose.msra.mxu0 0.0
    %861 = vmatprep.subr.mxu0 0.0
    %862 = vmatpush2.xpose.msra.mxu0 0.0
    %863 = vmatprep.subr.mxu0 0.0
    %864 = vmatpush2.xpose.msra.mxu0 0.0
    %865 = vmatprep.subr.mxu0 0.0
    %866 = vmatpush2.xpose.msra.mxu0 0.0
    %867 = vmatprep.subr.mxu0 0.0
    %868 = vmatpush2.xpose.msra.mxu0 0.0
    %869 = vmatprep.subr.mxu0 0.0
    %870 = vmatpush2.xpose.msra.mxu0 0.0
    %871 = vmatprep.mubr.f32.mxu0 0.0
    %872 = vmatmul.mubr.f32.gmra.mxu0 %v803
    %v873 = vpop.f32.mrf.mxu0
    %v874 = vadd.f32 0.0, %v873
    %v875 = vpop.f32.mrf.mxu0
    %876 = vdwg.mxu0
    %v877 = vmul.f32 %v796, 0.125
    %v878 = vmul.f32 %v874, 0.125
    %v879 = vsel %vm552, %v877, -inf
    %880 = vmax.xlane.f32.xlu0 %v879
    %v881 = vpop.xlane.xlu0 %880
    %v882 = vsel %vm552, %v878, -inf
    %883 = vmax.xlane.f32.xlu0 %v882
    %v884 = vpop.xlane.xlu0 %883
    %v885 = vsub.f32 %v877, %v881
    %v886 = vsub.f32 %v878, %v884
    %v887 = vmul.f32 %v885, 1.442695
    %v888 = vpow.pop %v887
    %v889 = vmul.f32 %v886, 1.442695
    %v890 = vpow.pop %v889
    %v891 = vsel %vm552, %v888, 0.0
    %892 = vadd.xlane.f32.xlu0 %v891
    %v893 = vpop.xlane.xlu0 %892
    %v894 = vsel %vm552, %v890, 0.0
    %895 = vadd.xlane.f32.xlu0 %v894
    %v896 = vpop.xlane.xlu0 %895
    %v897 = vrcp.pop %v893
    %v898 = vrcp.pop %v896
    %v899 = vmul.f32 %v888, %v897
    %v900 = vmul.f32 %v890, %v898
    %902 = vrot.lane.b32.xlu0 %v393, 64
    %v903 = vpop.permute.xlu0 %902
    %v906 = vsel %vm552, %v899, 0
    %908 = vmatprep.subr.mxu0 0.0
    %909 = vmatpush1.msra.mxu0 0.0
    %910 = vmatprep.subr.mxu0 0.0
    %911 = vmatpush1.msra.mxu0 0.0
    %912 = vmatprep.subr.mxu0 0.0
    %913 = vmatpush1.msra.mxu0 0.0
    %914 = vmatprep.subr.mxu0 0.0
    %915 = vmatpush1.msra.mxu0 0.0
    %916 = vmatprep.subr.mxu0 0.0
    %917 = vmatpush1.msra.mxu0 0.0
    %918 = vmatprep.subr.mxu0 0.0
    %919 = vmatpush1.msra.mxu0 0.0
    %920 = vmatprep.subr.mxu0 0.0
    %921 = vmatpush1.msra.mxu0 0.0
    %922 = vmatprep.subr.mxu0 0.0
    %923 = vmatpush1.msra.mxu0 0.0
    %924 = vmatprep.subr.mxu0 0.0
    %925 = vmatpush1.msra.mxu0 0.0
    %926 = vmatprep.subr.mxu0 0.0
    %927 = vmatpush1.msra.mxu0 0.0
    %928 = vmatprep.subr.mxu0 0.0
    %929 = vmatpush1.msra.mxu0 0.0
    %930 = vmatprep.subr.mxu0 0.0
    %931 = vmatpush1.msra.mxu0 0.0
    %932 = vmatprep.subr.mxu0 0.0
    %933 = vmatpush1.msra.mxu0 0.0
    %934 = vmatprep.subr.mxu0 0.0
    %935 = vmatpush1.msra.mxu0 0.0
    %936 = vmatprep.subr.mxu0 0.0
    %937 = vmatpush1.msra.mxu0 0.0
    %938 = vmatprep.subr.mxu0 0.0
    %939 = vmatpush1.msra.mxu0 %v903
    %940 = vmatprep.subr.mxu0 0.0
    %941 = vmatpush2.msra.mxu0 0.0
    %942 = vmatprep.subr.mxu0 0.0
    %943 = vmatpush2.msra.mxu0 0.0
    %944 = vmatprep.subr.mxu0 0.0
    %945 = vmatpush2.msra.mxu0 0.0
    %946 = vmatprep.subr.mxu0 0.0
    %947 = vmatpush2.msra.mxu0 0.0
    %948 = vmatprep.subr.mxu0 0.0
    %949 = vmatpush2.msra.mxu0 0.0
    %950 = vmatprep.subr.mxu0 0.0
    %951 = vmatpush2.msra.mxu0 0.0
    %952 = vmatprep.subr.mxu0 0.0
    %953 = vmatpush2.msra.mxu0 0.0
    %954 = vmatprep.subr.mxu0 0.0
    %955 = vmatpush2.msra.mxu0 0.0
    %956 = vmatprep.subr.mxu0 0.0
    %957 = vmatpush2.msra.mxu0 0.0
    %958 = vmatprep.subr.mxu0 0.0
    %959 = vmatpush2.msra.mxu0 0.0
    %960 = vmatprep.subr.mxu0 0.0
    %961 = vmatpush2.msra.mxu0 0.0
    %962 = vmatprep.subr.mxu0 0.0
    %963 = vmatpush2.msra.mxu0 0.0
    %964 = vmatprep.subr.mxu0 0.0
    %965 = vmatpush2.msra.mxu0 0.0
    %966 = vmatprep.subr.mxu0 0.0
    %967 = vmatpush2.msra.mxu0 0.0
    %968 = vmatprep.subr.mxu0 0.0
    %969 = vmatpush2.msra.mxu0 0.0
    %970 = vmatprep.subr.mxu0 0.0
    %971 = vmatpush2.msra.mxu0 0.0
    %972 = vmatprep.mubr.f32.mxu0 0.0
    %973 = vmatmul.mubr.f32.gmra.mxu0 %v906
    %v974 = vpop.f32.mrf.mxu0
    %v975 = vadd.f32 0.0, %v974
    %v976 = vpop.f32.mrf.mxu0
    %977 = vdwg.mxu0
    %979 = vrot.lane.b32.xlu0 %v395, 64
    %v980 = vpop.permute.xlu0 %979
    %v983 = vsel %vm552, %v900, 0
    %985 = vmatprep.subr.mxu0 0.0
    %986 = vmatpush1.msra.mxu0 0.0
    %987 = vmatprep.subr.mxu0 0.0
    %988 = vmatpush1.msra.mxu0 0.0
    %989 = vmatprep.subr.mxu0 0.0
    %990 = vmatpush1.msra.mxu0 0.0
    %991 = vmatprep.subr.mxu0 0.0
    %992 = vmatpush1.msra.mxu0 0.0
    %993 = vmatprep.subr.mxu0 0.0
    %994 = vmatpush1.msra.mxu0 0.0
    %995 = vmatprep.subr.mxu0 0.0
    %996 = vmatpush1.msra.mxu0 0.0
    %997 = vmatprep.subr.mxu0 0.0
    %998 = vmatpush1.msra.mxu0 0.0
    %999 = vmatprep.subr.mxu0 0.0
    %1000 = vmatpush1.msra.mxu0 0.0
    %1001 = vmatprep.subr.mxu0 0.0
    %1002 = vmatpush1.msra.mxu0 0.0
    %1003 = vmatprep.subr.mxu0 0.0
    %1004 = vmatpush1.msra.mxu0 0.0
    %1005 = vmatprep.subr.mxu0 0.0
    %1006 = vmatpush1.msra.mxu0 0.0
    %1007 = vmatprep.subr.mxu0 0.0
    %1008 = vmatpush1.msra.mxu0 0.0
    %1009 = vmatprep.subr.mxu0 0.0
    %1010 = vmatpush1.msra.mxu0 0.0
    %1011 = vmatprep.subr.mxu0 0.0
    %1012 = vmatpush1.msra.mxu0 0.0
    %1013 = vmatprep.subr.mxu0 0.0
    %1014 = vmatpush1.msra.mxu0 0.0
    %1015 = vmatprep.subr.mxu0 0.0
    %1016 = vmatpush1.msra.mxu0 %v980
    %1017 = vmatprep.subr.mxu0 0.0
    %1018 = vmatpush2.msra.mxu0 0.0
    %1019 = vmatprep.subr.mxu0 0.0
    %1020 = vmatpush2.msra.mxu0 0.0
    %1021 = vmatprep.subr.mxu0 0.0
    %1022 = vmatpush2.msra.mxu0 0.0
    %1023 = vmatprep.subr.mxu0 0.0
    %1024 = vmatpush2.msra.mxu0 0.0
    %1025 = vmatprep.subr.mxu0 0.0
    %1026 = vmatpush2.msra.mxu0 0.0
    %1027 = vmatprep.subr.mxu0 0.0
    %1028 = vmatpush2.msra.mxu0 0.0
    %1029 = vmatprep.subr.mxu0 0.0
    %1030 = vmatpush2.msra.mxu0 0.0
    %1031 = vmatprep.subr.mxu0 0.0
    %1032 = vmatpush2.msra.mxu0 0.0
    %1033 = vmatprep.subr.mxu0 0.0
    %1034 = vmatpush2.msra.mxu0 0.0
    %1035 = vmatprep.subr.mxu0 0.0
    %1036 = vmatpush2.msra.mxu0 0.0
    %1037 = vmatprep.subr.mxu0 0.0
    %1038 = vmatpush2.msra.mxu0 0.0
    %1039 = vmatprep.subr.mxu0 0.0
    %1040 = vmatpush2.msra.mxu0 0.0
    %1041 = vmatprep.subr.mxu0 0.0
    %1042 = vmatpush2.msra.mxu0 0.0
    %1043 = vmatprep.subr.mxu0 0.0
    %1044 = vmatpush2.msra.mxu0 0.0
    %1045 = vmatprep.subr.mxu0 0.0
    %1046 = vmatpush2.msra.mxu0 0.0
    %1047 = vmatprep.subr.mxu0 0.0
    %1048 = vmatpush2.msra.mxu0 0.0
    %1049 = vmatprep.mubr.f32.mxu0 0.0
    %1050 = vmatmul.mubr.f32.gmra.mxu0 %v983
    %v1051 = vpop.f32.mrf.mxu0
    %v1052 = vadd.f32 0.0, %v1051
    %v1053 = vpop.f32.mrf.mxu0
    %1054 = vdwg.mxu0
    %v1056 = vsel %vm397, %v362, 0
    %v1059 = vsel %vm397, %v378, 0
    %1061 = vmatprep.subr.mxu0 0.0
    %1062 = vmatpush1.xpose.msra.mxu0 0.0
    %1063 = vmatprep.subr.mxu0 0.0
    %1064 = vmatpush1.xpose.msra.mxu0 0.0
    %1065 = vmatprep.subr.mxu0 0.0
    %1066 = vmatpush1.xpose.msra.mxu0 0.0
    %1067 = vmatprep.subr.mxu0 0.0
    %1068 = vmatpush1.xpose.msra.mxu0 0.0
    %1069 = vmatprep.subr.mxu0 0.0
    %1070 = vmatpush1.xpose.msra.mxu0 0.0
    %1071 = vmatprep.subr.mxu0 0.0
    %1072 = vmatpush1.xpose.msra.mxu0 0.0
    %1073 = vmatprep.subr.mxu0 0.0
    %1074 = vmatpush1.xpose.msra.mxu0 0.0
    %1075 = vmatprep.subr.mxu0 0.0
    %1076 = vmatpush1.xpose.msra.mxu0 0.0
    %1077 = vmatprep.subr.mxu0 0.0
    %1078 = vmatpush1.xpose.msra.mxu0 0.0
    %1079 = vmatprep.subr.mxu0 0.0
    %1080 = vmatpush1.xpose.msra.mxu0 0.0
    %1081 = vmatprep.subr.mxu0 0.0
    %1082 = vmatpush1.xpose.msra.mxu0 0.0
    %1083 = vmatprep.subr.mxu0 0.0
    %1084 = vmatpush1.xpose.msra.mxu0 0.0
    %1085 = vmatprep.subr.mxu0 0.0
    %1086 = vmatpush1.xpose.msra.mxu0 0.0
    %1087 = vmatprep.subr.mxu0 0.0
    %1088 = vmatpush1.xpose.msra.mxu0 0.0
    %1089 = vmatprep.subr.mxu0 0.0
    %1090 = vmatpush1.xpose.msra.mxu0 0.0
    %1091 = vmatprep.subr.mxu0 0.0
    %1092 = vmatpush1.xpose.msra.mxu0 %v1059
    %1093 = vmatprep.subr.mxu0 0.0
    %1094 = vmatpush2.xpose.msra.mxu0 0.0
    %1095 = vmatprep.subr.mxu0 0.0
    %1096 = vmatpush2.xpose.msra.mxu0 0.0
    %1097 = vmatprep.subr.mxu0 0.0
    %1098 = vmatpush2.xpose.msra.mxu0 0.0
    %1099 = vmatprep.subr.mxu0 0.0
    %1100 = vmatpush2.xpose.msra.mxu0 0.0
    %1101 = vmatprep.subr.mxu0 0.0
    %1102 = vmatpush2.xpose.msra.mxu0 0.0
    %1103 = vmatprep.subr.mxu0 0.0
    %1104 = vmatpush2.xpose.msra.mxu0 0.0
    %1105 = vmatprep.subr.mxu0 0.0
    %1106 = vmatpush2.xpose.msra.mxu0 0.0
    %1107 = vmatprep.subr.mxu0 0.0
    %1108 = vmatpush2.xpose.msra.mxu0 0.0
    %1109 = vmatprep.subr.mxu0 0.0
    %1110 = vmatpush2.xpose.msra.mxu0 0.0
    %1111 = vmatprep.subr.mxu0 0.0
    %1112 = vmatpush2.xpose.msra.mxu0 0.0
    %1113 = vmatprep.subr.mxu0 0.0
    %1114 = vmatpush2.xpose.msra.mxu0 0.0
    %1115 = vmatprep.subr.mxu0 0.0
    %1116 = vmatpush2.xpose.msra.mxu0 0.0
    %1117 = vmatprep.subr.mxu0 0.0
    %1118 = vmatpush2.xpose.msra.mxu0 0.0
    %1119 = vmatprep.subr.mxu0 0.0
    %1120 = vmatpush2.xpose.msra.mxu0 0.0
    %1121 = vmatprep.subr.mxu0 0.0
    %1122 = vmatpush2.xpose.msra.mxu0 0.0
    %1123 = vmatprep.subr.mxu0 0.0
    %1124 = vmatpush2.xpose.msra.mxu0 0.0
    %1125 = vmatprep.mubr.f32.mxu0 0.0
    %1126 = vmatmul.mubr.f32.gmra.mxu0 %v1056
    %v1127 = vpop.f32.mrf.mxu0
    %v1128 = vadd.f32 0.0, %v1127
    %v1129 = vpop.f32.mrf.mxu0
    %1130 = vdwg.mxu0
    %v1132 = vsel %vm397, %v364, 0
    %v1135 = vsel %vm397, %v380, 0
    %1137 = vmatprep.subr.mxu0 0.0
    %1138 = vmatpush1.xpose.msra.mxu0 0.0
    %1139 = vmatprep.subr.mxu0 0.0
    %1140 = vmatpush1.xpose.msra.mxu0 0.0
    %1141 = vmatprep.subr.mxu0 0.0
    %1142 = vmatpush1.xpose.msra.mxu0 0.0
    %1143 = vmatprep.subr.mxu0 0.0
    %1144 = vmatpush1.xpose.msra.mxu0 0.0
    %1145 = vmatprep.subr.mxu0 0.0
    %1146 = vmatpush1.xpose.msra.mxu0 0.0
    %1147 = vmatprep.subr.mxu0 0.0
    %1148 = vmatpush1.xpose.msra.mxu0 0.0
    %1149 = vmatprep.subr.mxu0 0.0
    %1150 = vmatpush1.xpose.msra.mxu0 0.0
    %1151 = vmatprep.subr.mxu0 0.0
    %1152 = vmatpush1.xpose.msra.mxu0 0.0
    %1153 = vmatprep.subr.mxu0 0.0
    %1154 = vmatpush1.xpose.msra.mxu0 0.0
    %1155 = vmatprep.subr.mxu0 0.0
    %1156 = vmatpush1.xpose.msra.mxu0 0.0
    %1157 = vmatprep.subr.mxu0 0.0
    %1158 = vmatpush1.xpose.msra.mxu0 0.0
    %1159 = vmatprep.subr.mxu0 0.0
    %1160 = vmatpush1.xpose.msra.mxu0 0.0
    %1161 = vmatprep.subr.mxu0 0.0
    %1162 = vmatpush1.xpose.msra.mxu0 0.0
    %1163 = vmatprep.subr.mxu0 0.0
    %1164 = vmatpush1.xpose.msra.mxu0 0.0
    %1165 = vmatprep.subr.mxu0 0.0
    %1166 = vmatpush1.xpose.msra.mxu0 0.0
    %1167 = vmatprep.subr.mxu0 0.0
    %1168 = vmatpush1.xpose.msra.mxu0 %v1135
    %1169 = vmatprep.subr.mxu0 0.0
    %1170 = vmatpush2.xpose.msra.mxu0 0.0
    %1171 = vmatprep.subr.mxu0 0.0
    %1172 = vmatpush2.xpose.msra.mxu0 0.0
    %1173 = vmatprep.subr.mxu0 0.0
    %1174 = vmatpush2.xpose.msra.mxu0 0.0
    %1175 = vmatprep.subr.mxu0 0.0
    %1176 = vmatpush2.xpose.msra.mxu0 0.0
    %1177 = vmatprep.subr.mxu0 0.0
    %1178 = vmatpush2.xpose.msra.mxu0 0.0
    %1179 = vmatprep.subr.mxu0 0.0
    %1180 = vmatpush2.xpose.msra.mxu0 0.0
    %1181 = vmatprep.subr.mxu0 0.0
    %1182 = vmatpush2.xpose.msra.mxu0 0.0
    %1183 = vmatprep.subr.mxu0 0.0
    %1184 = vmatpush2.xpose.msra.mxu0 0.0
    %1185 = vmatprep.subr.mxu0 0.0
    %1186 = vmatpush2.xpose.msra.mxu0 0.0
    %1187 = vmatprep.subr.mxu0 0.0
    %1188 = vmatpush2.xpose.msra.mxu0 0.0
    %1189 = vmatprep.subr.mxu0 0.0
    %1190 = vmatpush2.xpose.msra.mxu0 0.0
    %1191 = vmatprep.subr.mxu0 0.0
    %1192 = vmatpush2.xpose.msra.mxu0 0.0
    %1193 = vmatprep.subr.mxu0 0.0
    %1194 = vmatpush2.xpose.msra.mxu0 0.0
    %1195 = vmatprep.subr.mxu0 0.0
    %1196 = vmatpush2.xpose.msra.mxu0 0.0
    %1197 = vmatprep.subr.mxu0 0.0
    %1198 = vmatpush2.xpose.msra.mxu0 0.0
    %1199 = vmatprep.subr.mxu0 0.0
    %1200 = vmatpush2.xpose.msra.mxu0 0.0
    %1201 = vmatprep.mubr.f32.mxu0 0.0
    %1202 = vmatmul.mubr.f32.gmra.mxu0 %v1132
    %v1203 = vpop.f32.mrf.mxu0
    %v1204 = vadd.f32 0.0, %v1203
    %v1205 = vpop.f32.mrf.mxu0
    %1206 = vdwg.mxu0
    %v1207 = vmul.f32 %v1128, 0.125
    %v1208 = vmul.f32 %v1204, 0.125
    %v1209 = vsel %vm552, %v1207, -inf
    %1210 = vmax.xlane.f32.xlu0 %v1209
    %v1211 = vpop.xlane.xlu0 %1210
    %v1212 = vsel %vm552, %v1208, -inf
    %1213 = vmax.xlane.f32.xlu0 %v1212
    %v1214 = vpop.xlane.xlu0 %1213
    %v1215 = vsub.f32 %v1207, %v1211
    %v1216 = vsub.f32 %v1208, %v1214
    %v1217 = vmul.f32 %v1215, 1.442695
    %v1218 = vpow.pop %v1217
    %v1219 = vmul.f32 %v1216, 1.442695
    %v1220 = vpow.pop %v1219
    %v1221 = vsel %vm552, %v1218, 0.0
    %1222 = vadd.xlane.f32.xlu0 %v1221
    %v1223 = vpop.xlane.xlu0 %1222
    %v1224 = vsel %vm552, %v1220, 0.0
    %1225 = vadd.xlane.f32.xlu0 %v1224
    %v1226 = vpop.xlane.xlu0 %1225
    %v1227 = vrcp.pop %v1223
    %v1228 = vrcp.pop %v1226
    %v1229 = vmul.f32 %v1218, %v1227
    %v1230 = vmul.f32 %v1220, %v1228
    %v1232 = vsel %vm552, %v1229, 0
    %1234 = vmatprep.subr.mxu0 0.0
    %1235 = vmatpush1.msra.mxu0 0.0
    %1236 = vmatprep.subr.mxu0 0.0
    %1237 = vmatpush1.msra.mxu0 0.0
    %1238 = vmatprep.subr.mxu0 0.0
    %1239 = vmatpush1.msra.mxu0 0.0
    %1240 = vmatprep.subr.mxu0 0.0
    %1241 = vmatpush1.msra.mxu0 0.0
    %1242 = vmatprep.subr.mxu0 0.0
    %1243 = vmatpush1.msra.mxu0 0.0
    %1244 = vmatprep.subr.mxu0 0.0
    %1245 = vmatpush1.msra.mxu0 0.0
    %1246 = vmatprep.subr.mxu0 0.0
    %1247 = vmatpush1.msra.mxu0 0.0
    %1248 = vmatprep.subr.mxu0 0.0
    %1249 = vmatpush1.msra.mxu0 0.0
    %1250 = vmatprep.subr.mxu0 0.0
    %1251 = vmatpush1.msra.mxu0 0.0
    %1252 = vmatprep.subr.mxu0 0.0
    %1253 = vmatpush1.msra.mxu0 0.0
    %1254 = vmatprep.subr.mxu0 0.0
    %1255 = vmatpush1.msra.mxu0 0.0
    %1256 = vmatprep.subr.mxu0 0.0
    %1257 = vmatpush1.msra.mxu0 0.0
    %1258 = vmatprep.subr.mxu0 0.0
    %1259 = vmatpush1.msra.mxu0 0.0
    %1260 = vmatprep.subr.mxu0 0.0
    %1261 = vmatpush1.msra.mxu0 0.0
    %1262 = vmatprep.subr.mxu0 0.0
    %1263 = vmatpush1.msra.mxu0 0.0
    %1264 = vmatprep.subr.mxu0 0.0
    %1265 = vmatpush1.msra.mxu0 %v394
    %1266 = vmatprep.subr.mxu0 0.0
    %1267 = vmatpush2.msra.mxu0 0.0
    %1268 = vmatprep.subr.mxu0 0.0
    %1269 = vmatpush2.msra.mxu0 0.0
    %1270 = vmatprep.subr.mxu0 0.0
    %1271 = vmatpush2.msra.mxu0 0.0
    %1272 = vmatprep.subr.mxu0 0.0
    %1273 = vmatpush2.msra.mxu0 0.0
    %1274 = vmatprep.subr.mxu0 0.0
    %1275 = vmatpush2.msra.mxu0 0.0
    %1276 = vmatprep.subr.mxu0 0.0
    %1277 = vmatpush2.msra.mxu0 0.0
    %1278 = vmatprep.subr.mxu0 0.0
    %1279 = vmatpush2.msra.mxu0 0.0
    %1280 = vmatprep.subr.mxu0 0.0
    %1281 = vmatpush2.msra.mxu0 0.0
    %1282 = vmatprep.subr.mxu0 0.0
    %1283 = vmatpush2.msra.mxu0 0.0
    %1284 = vmatprep.subr.mxu0 0.0
    %1285 = vmatpush2.msra.mxu0 0.0
    %1286 = vmatprep.subr.mxu0 0.0
    %1287 = vmatpush2.msra.mxu0 0.0
    %1288 = vmatprep.subr.mxu0 0.0
    %1289 = vmatpush2.msra.mxu0 0.0
    %1290 = vmatprep.subr.mxu0 0.0
    %1291 = vmatpush2.msra.mxu0 0.0
    %1292 = vmatprep.subr.mxu0 0.0
    %1293 = vmatpush2.msra.mxu0 0.0
    %1294 = vmatprep.subr.mxu0 0.0
    %1295 = vmatpush2.msra.mxu0 0.0
    %1296 = vmatprep.subr.mxu0 0.0
    %1297 = vmatpush2.msra.mxu0 0.0
    %1298 = vmatprep.mubr.f32.mxu0 0.0
    %1299 = vmatmul.mubr.f32.gmra.mxu0 %v1232
    %v1300 = vpop.f32.mrf.mxu0
    %v1301 = vadd.f32 0.0, %v1300
    %v1302 = vpop.f32.mrf.mxu0
    %1303 = vdwg.mxu0
    %v1305 = vsel %vm552, %v1230, 0
    %1307 = vmatprep.subr.mxu0 0.0
    %1308 = vmatpush1.msra.mxu0 0.0
    %1309 = vmatprep.subr.mxu0 0.0
    %1310 = vmatpush1.msra.mxu0 0.0
    %1311 = vmatprep.subr.mxu0 0.0
    %1312 = vmatpush1.msra.mxu0 0.0
    %1313 = vmatprep.subr.mxu0 0.0
    %1314 = vmatpush1.msra.mxu0 0.0
    %1315 = vmatprep.subr.mxu0 0.0
    %1316 = vmatpush1.msra.mxu0 0.0
    %1317 = vmatprep.subr.mxu0 0.0
    %1318 = vmatpush1.msra.mxu0 0.0
    %1319 = vmatprep.subr.mxu0 0.0
    %1320 = vmatpush1.msra.mxu0 0.0
    %1321 = vmatprep.subr.mxu0 0.0
    %1322 = vmatpush1.msra.mxu0 0.0
    %1323 = vmatprep.subr.mxu0 0.0
    %1324 = vmatpush1.msra.mxu0 0.0
    %1325 = vmatprep.subr.mxu0 0.0
    %1326 = vmatpush1.msra.mxu0 0.0
    %1327 = vmatprep.subr.mxu0 0.0
    %1328 = vmatpush1.msra.mxu0 0.0
    %1329 = vmatprep.subr.mxu0 0.0
    %1330 = vmatpush1.msra.mxu0 0.0
    %1331 = vmatprep.subr.mxu0 0.0
    %1332 = vmatpush1.msra.mxu0 0.0
    %1333 = vmatprep.subr.mxu0 0.0
    %1334 = vmatpush1.msra.mxu0 0.0
    %1335 = vmatprep.subr.mxu0 0.0
    %1336 = vmatpush1.msra.mxu0 0.0
    %1337 = vmatprep.subr.mxu0 0.0
    %1338 = vmatpush1.msra.mxu0 %v396
    %1339 = vmatprep.subr.mxu0 0.0
    %1340 = vmatpush2.msra.mxu0 0.0
    %1341 = vmatprep.subr.mxu0 0.0
    %1342 = vmatpush2.msra.mxu0 0.0
    %1343 = vmatprep.subr.mxu0 0.0
    %1344 = vmatpush2.msra.mxu0 0.0
    %1345 = vmatprep.subr.mxu0 0.0
    %1346 = vmatpush2.msra.mxu0 0.0
    %1347 = vmatprep.subr.mxu0 0.0
    %1348 = vmatpush2.msra.mxu0 0.0
    %1349 = vmatprep.subr.mxu0 0.0
    %1350 = vmatpush2.msra.mxu0 0.0
    %1351 = vmatprep.subr.mxu0 0.0
    %1352 = vmatpush2.msra.mxu0 0.0
    %1353 = vmatprep.subr.mxu0 0.0
    %1354 = vmatpush2.msra.mxu0 0.0
    %1355 = vmatprep.subr.mxu0 0.0
    %1356 = vmatpush2.msra.mxu0 0.0
    %1357 = vmatprep.subr.mxu0 0.0
    %1358 = vmatpush2.msra.mxu0 0.0
    %1359 = vmatprep.subr.mxu0 0.0
    %1360 = vmatpush2.msra.mxu0 0.0
    %1361 = vmatprep.subr.mxu0 0.0
    %1362 = vmatpush2.msra.mxu0 0.0
    %1363 = vmatprep.subr.mxu0 0.0
    %1364 = vmatpush2.msra.mxu0 0.0
    %1365 = vmatprep.subr.mxu0 0.0
    %1366 = vmatpush2.msra.mxu0 0.0
    %1367 = vmatprep.subr.mxu0 0.0
    %1368 = vmatpush2.msra.mxu0 0.0
    %1369 = vmatprep.subr.mxu0 0.0
    %1370 = vmatpush2.msra.mxu0 0.0
    %1371 = vmatprep.mubr.f32.mxu0 0.0
    %1372 = vmatmul.mubr.f32.gmra.mxu0 %v1305
    %v1373 = vpop.f32.mrf.mxu0
    %v1374 = vadd.f32 0.0, %v1373
    %v1375 = vpop.f32.mrf.mxu0
    %1376 = vdwg.mxu0
    %1377 = vrot.lane.b32.xlu0 %v362, 64
    %v1378 = vpop.permute.xlu0 %1377
    %1379 = vrot.lane.b32.xlu0 %v378, 64
    %v1380 = vpop.permute.xlu0 %1379
    %v1381 = vsel %vm397, %v1378, 0
    %v1383 = vsel %vm397, %v1380, 0
    %1385 = vmatprep.subr.mxu0 0.0
    %1386 = vmatpush1.xpose.msra.mxu0 0.0
    %1387 = vmatprep.subr.mxu0 0.0
    %1388 = vmatpush1.xpose.msra.mxu0 0.0
    %1389 = vmatprep.subr.mxu0 0.0
    %1390 = vmatpush1.xpose.msra.mxu0 0.0
    %1391 = vmatprep.subr.mxu0 0.0
    %1392 = vmatpush1.xpose.msra.mxu0 0.0
    %1393 = vmatprep.subr.mxu0 0.0
    %1394 = vmatpush1.xpose.msra.mxu0 0.0
    %1395 = vmatprep.subr.mxu0 0.0
    %1396 = vmatpush1.xpose.msra.mxu0 0.0
    %1397 = vmatprep.subr.mxu0 0.0
    %1398 = vmatpush1.xpose.msra.mxu0 0.0
    %1399 = vmatprep.subr.mxu0 0.0
    %1400 = vmatpush1.xpose.msra.mxu0 0.0
    %1401 = vmatprep.subr.mxu0 0.0
    %1402 = vmatpush1.xpose.msra.mxu0 0.0
    %1403 = vmatprep.subr.mxu0 0.0
    %1404 = vmatpush1.xpose.msra.mxu0 0.0
    %1405 = vmatprep.subr.mxu0 0.0
    %1406 = vmatpush1.xpose.msra.mxu0 0.0
    %1407 = vmatprep.subr.mxu0 0.0
    %1408 = vmatpush1.xpose.msra.mxu0 0.0
    %1409 = vmatprep.subr.mxu0 0.0
    %1410 = vmatpush1.xpose.msra.mxu0 0.0
    %1411 = vmatprep.subr.mxu0 0.0
    %1412 = vmatpush1.xpose.msra.mxu0 0.0
    %1413 = vmatprep.subr.mxu0 0.0
    %1414 = vmatpush1.xpose.msra.mxu0 0.0
    %1415 = vmatprep.subr.mxu0 0.0
    %1416 = vmatpush1.xpose.msra.mxu0 %v1383
    %1417 = vmatprep.subr.mxu0 0.0
    %1418 = vmatpush2.xpose.msra.mxu0 0.0
    %1419 = vmatprep.subr.mxu0 0.0
    %1420 = vmatpush2.xpose.msra.mxu0 0.0
    %1421 = vmatprep.subr.mxu0 0.0
    %1422 = vmatpush2.xpose.msra.mxu0 0.0
    %1423 = vmatprep.subr.mxu0 0.0
    %1424 = vmatpush2.xpose.msra.mxu0 0.0
    %1425 = vmatprep.subr.mxu0 0.0
    %1426 = vmatpush2.xpose.msra.mxu0 0.0
    %1427 = vmatprep.subr.mxu0 0.0
    %1428 = vmatpush2.xpose.msra.mxu0 0.0
    %1429 = vmatprep.subr.mxu0 0.0
    %1430 = vmatpush2.xpose.msra.mxu0 0.0
    %1431 = vmatprep.subr.mxu0 0.0
    %1432 = vmatpush2.xpose.msra.mxu0 0.0
    %1433 = vmatprep.subr.mxu0 0.0
    %1434 = vmatpush2.xpose.msra.mxu0 0.0
    %1435 = vmatprep.subr.mxu0 0.0
    %1436 = vmatpush2.xpose.msra.mxu0 0.0
    %1437 = vmatprep.subr.mxu0 0.0
    %1438 = vmatpush2.xpose.msra.mxu0 0.0
    %1439 = vmatprep.subr.mxu0 0.0
    %1440 = vmatpush2.xpose.msra.mxu0 0.0
    %1441 = vmatprep.subr.mxu0 0.0
    %1442 = vmatpush2.xpose.msra.mxu0 0.0
    %1443 = vmatprep.subr.mxu0 0.0
    %1444 = vmatpush2.xpose.msra.mxu0 0.0
    %1445 = vmatprep.subr.mxu0 0.0
    %1446 = vmatpush2.xpose.msra.mxu0 0.0
    %1447 = vmatprep.subr.mxu0 0.0
    %1448 = vmatpush2.xpose.msra.mxu0 0.0
    %1449 = vmatprep.mubr.f32.mxu0 0.0
    %1450 = vmatmul.mubr.f32.gmra.mxu0 %v1381
    %v1451 = vpop.f32.mrf.mxu0
    %v1452 = vadd.f32 0.0, %v1451
    %v1453 = vpop.f32.mrf.mxu0
    %1454 = vdwg.mxu0
    %1455 = vrot.lane.b32.xlu0 %v364, 64
    %v1456 = vpop.permute.xlu0 %1455
    %1457 = vrot.lane.b32.xlu0 %v380, 64
    %v1458 = vpop.permute.xlu0 %1457
    %v1459 = vsel %vm397, %v1456, 0
    %v1461 = vsel %vm397, %v1458, 0
    %1463 = vmatprep.subr.mxu0 0.0
    %1464 = vmatpush1.xpose.msra.mxu0 0.0
    %1465 = vmatprep.subr.mxu0 0.0
    %1466 = vmatpush1.xpose.msra.mxu0 0.0
    %1467 = vmatprep.subr.mxu0 0.0
    %1468 = vmatpush1.xpose.msra.mxu0 0.0
    %1469 = vmatprep.subr.mxu0 0.0
    %1470 = vmatpush1.xpose.msra.mxu0 0.0
    %1471 = vmatprep.subr.mxu0 0.0
    %1472 = vmatpush1.xpose.msra.mxu0 0.0
    %1473 = vmatprep.subr.mxu0 0.0
    %1474 = vmatpush1.xpose.msra.mxu0 0.0
    %1475 = vmatprep.subr.mxu0 0.0
    %1476 = vmatpush1.xpose.msra.mxu0 0.0
    %1477 = vmatprep.subr.mxu0 0.0
    %1478 = vmatpush1.xpose.msra.mxu0 0.0
    %1479 = vmatprep.subr.mxu0 0.0
    %1480 = vmatpush1.xpose.msra.mxu0 0.0
    %1481 = vmatprep.subr.mxu0 0.0
    %1482 = vmatpush1.xpose.msra.mxu0 0.0
    %1483 = vmatprep.subr.mxu0 0.0
    %1484 = vmatpush1.xpose.msra.mxu0 0.0
    %1485 = vmatprep.subr.mxu0 0.0
    %1486 = vmatpush1.xpose.msra.mxu0 0.0
    %1487 = vmatprep.subr.mxu0 0.0
    %1488 = vmatpush1.xpose.msra.mxu0 0.0
    %1489 = vmatprep.subr.mxu0 0.0
    %1490 = vmatpush1.xpose.msra.mxu0 0.0
    %1491 = vmatprep.subr.mxu0 0.0
    %1492 = vmatpush1.xpose.msra.mxu0 0.0
    %1493 = vmatprep.subr.mxu0 0.0
    %1494 = vmatpush1.xpose.msra.mxu0 %v1461
    %1495 = vmatprep.subr.mxu0 0.0
    %1496 = vmatpush2.xpose.msra.mxu0 0.0
    %1497 = vmatprep.subr.mxu0 0.0
    %1498 = vmatpush2.xpose.msra.mxu0 0.0
    %1499 = vmatprep.subr.mxu0 0.0
    %1500 = vmatpush2.xpose.msra.mxu0 0.0
    %1501 = vmatprep.subr.mxu0 0.0
    %1502 = vmatpush2.xpose.msra.mxu0 0.0
    %1503 = vmatprep.subr.mxu0 0.0
    %1504 = vmatpush2.xpose.msra.mxu0 0.0
    %1505 = vmatprep.subr.mxu0 0.0
    %1506 = vmatpush2.xpose.msra.mxu0 0.0
    %1507 = vmatprep.subr.mxu0 0.0
    %1508 = vmatpush2.xpose.msra.mxu0 0.0
    %1509 = vmatprep.subr.mxu0 0.0
    %1510 = vmatpush2.xpose.msra.mxu0 0.0
    %1511 = vmatprep.subr.mxu0 0.0
    %1512 = vmatpush2.xpose.msra.mxu0 0.0
    %1513 = vmatprep.subr.mxu0 0.0
    %1514 = vmatpush2.xpose.msra.mxu0 0.0
    %1515 = vmatprep.subr.mxu0 0.0
    %1516 = vmatpush2.xpose.msra.mxu0 0.0
    %1517 = vmatprep.subr.mxu0 0.0
    %1518 = vmatpush2.xpose.msra.mxu0 0.0
    %1519 = vmatprep.subr.mxu0 0.0
    %1520 = vmatpush2.xpose.msra.mxu0 0.0
    %1521 = vmatprep.subr.mxu0 0.0
    %1522 = vmatpush2.xpose.msra.mxu0 0.0
    %1523 = vmatprep.subr.mxu0 0.0
    %1524 = vmatpush2.xpose.msra.mxu0 0.0
    %1525 = vmatprep.subr.mxu0 0.0
    %1526 = vmatpush2.xpose.msra.mxu0 0.0
    %1527 = vmatprep.mubr.f32.mxu0 0.0
    %1528 = vmatmul.mubr.f32.gmra.mxu0 %v1459
    %v1529 = vpop.f32.mrf.mxu0
    %v1530 = vadd.f32 0.0, %v1529
    %v1531 = vpop.f32.mrf.mxu0
    %1532 = vdwg.mxu0
    %v1533 = vmul.f32 %v1452, 0.125
    %v1534 = vmul.f32 %v1530, 0.125
    %v1535 = vsel %vm552, %v1533, -inf
    %1536 = vmax.xlane.f32.xlu0 %v1535
    %v1537 = vpop.xlane.xlu0 %1536
    %v1538 = vsel %vm552, %v1534, -inf
    %1539 = vmax.xlane.f32.xlu0 %v1538
    %v1540 = vpop.xlane.xlu0 %1539
    %v1541 = vsub.f32 %v1533, %v1537
    %v1542 = vsub.f32 %v1534, %v1540
    %v1543 = vmul.f32 %v1541, 1.442695
    %v1544 = vpow.pop %v1543
    %v1545 = vmul.f32 %v1542, 1.442695
    %v1546 = vpow.pop %v1545
    %v1547 = vsel %vm552, %v1544, 0.0
    %1548 = vadd.xlane.f32.xlu0 %v1547
    %v1549 = vpop.xlane.xlu0 %1548
    %v1550 = vsel %vm552, %v1546, 0.0
    %1551 = vadd.xlane.f32.xlu0 %v1550
    %v1552 = vpop.xlane.xlu0 %1551
    %v1553 = vrcp.pop %v1549
    %v1554 = vrcp.pop %v1552
    %v1555 = vmul.f32 %v1544, %v1553
    %v1556 = vmul.f32 %v1546, %v1554
    %1558 = vrot.lane.b32.xlu0 %v394, 64
    %v1559 = vpop.permute.xlu0 %1558
    %v1562 = vsel %vm552, %v1555, 0
    %1564 = vmatprep.subr.mxu0 0.0
    %1565 = vmatpush1.msra.mxu0 0.0
    %1566 = vmatprep.subr.mxu0 0.0
    %1567 = vmatpush1.msra.mxu0 0.0
    %1568 = vmatprep.subr.mxu0 0.0
    %1569 = vmatpush1.msra.mxu0 0.0
    %1570 = vmatprep.subr.mxu0 0.0
    %1571 = vmatpush1.msra.mxu0 0.0
    %1572 = vmatprep.subr.mxu0 0.0
    %1573 = vmatpush1.msra.mxu0 0.0
    %1574 = vmatprep.subr.mxu0 0.0
    %1575 = vmatpush1.msra.mxu0 0.0
    %1576 = vmatprep.subr.mxu0 0.0
    %1577 = vmatpush1.msra.mxu0 0.0
    %1578 = vmatprep.subr.mxu0 0.0
    %1579 = vmatpush1.msra.mxu0 0.0
    %1580 = vmatprep.subr.mxu0 0.0
    %1581 = vmatpush1.msra.mxu0 0.0
    %1582 = vmatprep.subr.mxu0 0.0
    %1583 = vmatpush1.msra.mxu0 0.0
    %1584 = vmatprep.subr.mxu0 0.0
    %1585 = vmatpush1.msra.mxu0 0.0
    %1586 = vmatprep.subr.mxu0 0.0
    %1587 = vmatpush1.msra.mxu0 0.0
    %1588 = vmatprep.subr.mxu0 0.0
    %1589 = vmatpush1.msra.mxu0 0.0
    %1590 = vmatprep.subr.mxu0 0.0
    %1591 = vmatpush1.msra.mxu0 0.0
    %1592 = vmatprep.subr.mxu0 0.0
    %1593 = vmatpush1.msra.mxu0 0.0
    %1594 = vmatprep.subr.mxu0 0.0
    %1595 = vmatpush1.msra.mxu0 %v1559
    %1596 = vmatprep.subr.mxu0 0.0
    %1597 = vmatpush2.msra.mxu0 0.0
    %1598 = vmatprep.subr.mxu0 0.0
    %1599 = vmatpush2.msra.mxu0 0.0
    %1600 = vmatprep.subr.mxu0 0.0
    %1601 = vmatpush2.msra.mxu0 0.0
    %1602 = vmatprep.subr.mxu0 0.0
    %1603 = vmatpush2.msra.mxu0 0.0
    %1604 = vmatprep.subr.mxu0 0.0
    %1605 = vmatpush2.msra.mxu0 0.0
    %1606 = vmatprep.subr.mxu0 0.0
    %1607 = vmatpush2.msra.mxu0 0.0
    %1608 = vmatprep.subr.mxu0 0.0
    %1609 = vmatpush2.msra.mxu0 0.0
    %1610 = vmatprep.subr.mxu0 0.0
    %1611 = vmatpush2.msra.mxu0 0.0
    %1612 = vmatprep.subr.mxu0 0.0
    %1613 = vmatpush2.msra.mxu0 0.0
    %1614 = vmatprep.subr.mxu0 0.0
    %1615 = vmatpush2.msra.mxu0 0.0
    %1616 = vmatprep.subr.mxu0 0.0
    %1617 = vmatpush2.msra.mxu0 0.0
    %1618 = vmatprep.subr.mxu0 0.0
    %1619 = vmatpush2.msra.mxu0 0.0
    %1620 = vmatprep.subr.mxu0 0.0
    %1621 = vmatpush2.msra.mxu0 0.0
    %1622 = vmatprep.subr.mxu0 0.0
    %1623 = vmatpush2.msra.mxu0 0.0
    %1624 = vmatprep.subr.mxu0 0.0
    %1625 = vmatpush2.msra.mxu0 0.0
    %1626 = vmatprep.subr.mxu0 0.0
    %1627 = vmatpush2.msra.mxu0 0.0
    %1628 = vmatprep.mubr.f32.mxu0 0.0
    %1629 = vmatmul.mubr.f32.gmra.mxu0 %v1562
    %v1630 = vpop.f32.mrf.mxu0
    %v1631 = vadd.f32 0.0, %v1630
    %v1632 = vpop.f32.mrf.mxu0
    %1633 = vdwg.mxu0
    %1635 = vrot.lane.b32.xlu0 %v396, 64
    %v1636 = vpop.permute.xlu0 %1635
    %v1639 = vsel %vm552, %v1556, 0
    %1641 = vmatprep.subr.mxu0 0.0
    %1642 = vmatpush1.msra.mxu0 0.0
    %1643 = vmatprep.subr.mxu0 0.0
    %1644 = vmatpush1.msra.mxu0 0.0
    %1645 = vmatprep.subr.mxu0 0.0
    %1646 = vmatpush1.msra.mxu0 0.0
    %1647 = vmatprep.subr.mxu0 0.0
    %1648 = vmatpush1.msra.mxu0 0.0
    %1649 = vmatprep.subr.mxu0 0.0
    %1650 = vmatpush1.msra.mxu0 0.0
    %1651 = vmatprep.subr.mxu0 0.0
    %1652 = vmatpush1.msra.mxu0 0.0
    %1653 = vmatprep.subr.mxu0 0.0
    %1654 = vmatpush1.msra.mxu0 0.0
    %1655 = vmatprep.subr.mxu0 0.0
    %1656 = vmatpush1.msra.mxu0 0.0
    %1657 = vmatprep.subr.mxu0 0.0
    %1658 = vmatpush1.msra.mxu0 0.0
    %1659 = vmatprep.subr.mxu0 0.0
    %1660 = vmatpush1.msra.mxu0 0.0
    %1661 = vmatprep.subr.mxu0 0.0
    %1662 = vmatpush1.msra.mxu0 0.0
    %1663 = vmatprep.subr.mxu0 0.0
    %1664 = vmatpush1.msra.mxu0 0.0
    %1665 = vmatprep.subr.mxu0 0.0
    %1666 = vmatpush1.msra.mxu0 0.0
    %1667 = vmatprep.subr.mxu0 0.0
    %1668 = vmatpush1.msra.mxu0 0.0
    %1669 = vmatprep.subr.mxu0 0.0
    %1670 = vmatpush1.msra.mxu0 0.0
    %1671 = vmatprep.subr.mxu0 0.0
    %1672 = vmatpush1.msra.mxu0 %v1636
    %1673 = vmatprep.subr.mxu0 0.0
    %1674 = vmatpush2.msra.mxu0 0.0
    %1675 = vmatprep.subr.mxu0 0.0
    %1676 = vmatpush2.msra.mxu0 0.0
    %1677 = vmatprep.subr.mxu0 0.0
    %1678 = vmatpush2.msra.mxu0 0.0
    %1679 = vmatprep.subr.mxu0 0.0
    %1680 = vmatpush2.msra.mxu0 0.0
    %1681 = vmatprep.subr.mxu0 0.0
    %1682 = vmatpush2.msra.mxu0 0.0
    %1683 = vmatprep.subr.mxu0 0.0
    %1684 = vmatpush2.msra.mxu0 0.0
    %1685 = vmatprep.subr.mxu0 0.0
    %1686 = vmatpush2.msra.mxu0 0.0
    %1687 = vmatprep.subr.mxu0 0.0
    %1688 = vmatpush2.msra.mxu0 0.0
    %1689 = vmatprep.subr.mxu0 0.0
    %1690 = vmatpush2.msra.mxu0 0.0
    %1691 = vmatprep.subr.mxu0 0.0
    %1692 = vmatpush2.msra.mxu0 0.0
    %1693 = vmatprep.subr.mxu0 0.0
    %1694 = vmatpush2.msra.mxu0 0.0
    %1695 = vmatprep.subr.mxu0 0.0
    %1696 = vmatpush2.msra.mxu0 0.0
    %1697 = vmatprep.subr.mxu0 0.0
    %1698 = vmatpush2.msra.mxu0 0.0
    %1699 = vmatprep.subr.mxu0 0.0
    %1700 = vmatpush2.msra.mxu0 0.0
    %1701 = vmatprep.subr.mxu0 0.0
    %1702 = vmatpush2.msra.mxu0 0.0
    %1703 = vmatprep.subr.mxu0 0.0
    %1704 = vmatpush2.msra.mxu0 0.0
    %1705 = vmatprep.mubr.f32.mxu0 0.0
    %1706 = vmatmul.mubr.f32.gmra.mxu0 %v1639
    %v1707 = vpop.f32.mrf.mxu0
    %v1708 = vadd.f32 0.0, %v1707
    %v1709 = vpop.f32.mrf.mxu0
    %1710 = vdwg.mxu0
    %1713 = vrot.lane.b32.xlu0 %v975, 64
    %v1714 = vpop.permute.xlu0 %1713
    %1715 = vrot.lane.b32.xlu0 %v1052, 64
    %v1716 = vpop.permute.xlu0 %1715
    %1721 = vrot.lane.b32.xlu0 %v1631, 64
    %v1722 = vpop.permute.xlu0 %1721
    %1723 = vrot.lane.b32.xlu0 %v1708, 64
    %v1724 = vpop.permute.xlu0 %1723
    %v1727 = vsel %vm397, %v645, %v1714
    %v1728 = vsel %vm397, %v718, %v1716
    %v1729 = vsel %vm397, %v1301, %v1722
    %v1730 = vsel %vm397, %v1374, %v1724
    %v1731 = vld [vmem:[%s3] sm:$0xff]
    %v1732 = vld [vmem:[%s3 + $0x8] sm:$0xff]
    %v1733 = vld [vmem:[%s3 + $0x10] sm:$0xff]
    %v1734 = vld [vmem:[%s3 + $0x18] sm:$0xff]
    %v1735 = vld [vmem:[%s3 + $0x20] sm:$0xff]
    %v1736 = vld [vmem:[%s3 + $0x28] sm:$0xff]
    %v1737 = vld [vmem:[%s3 + $0x30] sm:$0xff]
    %v1738 = vld [vmem:[%s3 + $0x38] sm:$0xff]
    %v1739 = vld [vmem:[%s3 + $0x40] sm:$0xff]
    %v1740 = vld [vmem:[%s3 + $0x48] sm:$0xff]
    %v1741 = vld [vmem:[%s3 + $0x50] sm:$0xff]
    %v1742 = vld [vmem:[%s3 + $0x58] sm:$0xff]
    %v1743 = vld [vmem:[%s3 + $0x60] sm:$0xff]
    %v1744 = vld [vmem:[%s3 + $0x68] sm:$0xff]
    %v1745 = vld [vmem:[%s3 + $0x70] sm:$0xff]
    %v1746 = vld [vmem:[%s3 + $0x78] sm:$0xff]
    %v1747 = vld [vmem:[%s3 + $0x80] sm:$0xff]
    %v1748 = vld [vmem:[%s3 + $0x88] sm:$0xff]
    %v1749 = vld [vmem:[%s3 + $0x90] sm:$0xff]
    %v1750 = vld [vmem:[%s3 + $0x98] sm:$0xff]
    %v1751 = vld [vmem:[%s3 + $0xa0] sm:$0xff]
    %v1752 = vld [vmem:[%s3 + $0xa8] sm:$0xff]
    %v1753 = vld [vmem:[%s3 + $0xb0] sm:$0xff]
    %v1754 = vld [vmem:[%s3 + $0xb8] sm:$0xff]
    %v1755 = vld [vmem:[%s3 + $0xc0] sm:$0xff]
    %v1756 = vld [vmem:[%s3 + $0xc8] sm:$0xff]
    %v1757 = vld [vmem:[%s3 + $0xd0] sm:$0xff]
    %v1758 = vld [vmem:[%s3 + $0xd8] sm:$0xff]
    %v1759 = vld [vmem:[%s3 + $0xe0] sm:$0xff]
    %v1760 = vld [vmem:[%s3 + $0xe8] sm:$0xff]
    %v1761 = vld [vmem:[%s3 + $0xf0] sm:$0xff]
    %v1762 = vld [vmem:[%s3 + $0xf8] sm:$0xff]
    %v1763 = vld [vmem:[%s4] sm:$0x1]
    %v1765 = vlaneseq
    %v1766 = vshrl.u32 %v1765, 7
    %v1767 = vsub.s32 0, %v1766
    %v1768 = vrot.slane %v1763, %v1767
    %1770 = vmatprep.subr.mxu0 0.0
    %1771 = vmatpush1.msra.mxu0 %v1746
    %1772 = vmatprep.subr.mxu0 0.0
    %1773 = vmatpush1.msra.mxu0 %v1745
    %1774 = vmatprep.subr.mxu0 0.0
    %1775 = vmatpush1.msra.mxu0 %v1744
    %1776 = vmatprep.subr.mxu0 0.0
    %1777 = vmatpush1.msra.mxu0 %v1743
    %1778 = vmatprep.subr.mxu0 0.0
    %1779 = vmatpush1.msra.mxu0 %v1742
    %1780 = vmatprep.subr.mxu0 0.0
    %1781 = vmatpush1.msra.mxu0 %v1741
    %1782 = vmatprep.subr.mxu0 0.0
    %1783 = vmatpush1.msra.mxu0 %v1740
    %1784 = vmatprep.subr.mxu0 0.0
    %1785 = vmatpush1.msra.mxu0 %v1739
    %1786 = vmatprep.subr.mxu0 0.0
    %1787 = vmatpush1.msra.mxu0 %v1738
    %1788 = vmatprep.subr.mxu0 0.0
    %1789 = vmatpush1.msra.mxu0 %v1737
    %1790 = vmatprep.subr.mxu0 0.0
    %1791 = vmatpush1.msra.mxu0 %v1736
    %1792 = vmatprep.subr.mxu0 0.0
    %1793 = vmatpush1.msra.mxu0 %v1735
    %1794 = vmatprep.subr.mxu0 0.0
    %1795 = vmatpush1.msra.mxu0 %v1734
    %1796 = vmatprep.subr.mxu0 0.0
    %1797 = vmatpush1.msra.mxu0 %v1733
    %1798 = vmatprep.subr.mxu0 0.0
    %1799 = vmatpush1.msra.mxu0 %v1732
    %1800 = vmatprep.subr.mxu0 0.0
    %1801 = vmatpush1.msra.mxu0 %v1731
    %1802 = vmatprep.subr.mxu0 0.0
    %1803 = vmatpush2.msra.mxu0 %v1762
    %1804 = vmatprep.subr.mxu0 0.0
    %1805 = vmatpush2.msra.mxu0 %v1761
    %1806 = vmatprep.subr.mxu0 0.0
    %1807 = vmatpush2.msra.mxu0 %v1760
    %1808 = vmatprep.subr.mxu0 0.0
    %1809 = vmatpush2.msra.mxu0 %v1759
    %1810 = vmatprep.subr.mxu0 0.0
    %1811 = vmatpush2.msra.mxu0 %v1758
    %1812 = vmatprep.subr.mxu0 0.0
    %1813 = vmatpush2.msra.mxu0 %v1757
    %1814 = vmatprep.subr.mxu0 0.0
    %1815 = vmatpush2.msra.mxu0 %v1756
    %1816 = vmatprep.subr.mxu0 0.0
    %1817 = vmatpush2.msra.mxu0 %v1755
    %1818 = vmatprep.subr.mxu0 0.0
    %1819 = vmatpush2.msra.mxu0 %v1754
    %1820 = vmatprep.subr.mxu0 0.0
    %1821 = vmatpush2.msra.mxu0 %v1753
    %1822 = vmatprep.subr.mxu0 0.0
    %1823 = vmatpush2.msra.mxu0 %v1752
    %1824 = vmatprep.subr.mxu0 0.0
    %1825 = vmatpush2.msra.mxu0 %v1751
    %1826 = vmatprep.subr.mxu0 0.0
    %1827 = vmatpush2.msra.mxu0 %v1750
    %1828 = vmatprep.subr.mxu0 0.0
    %1829 = vmatpush2.msra.mxu0 %v1749
    %1830 = vmatprep.subr.mxu0 0.0
    %1831 = vmatpush2.msra.mxu0 %v1748
    %1832 = vmatprep.subr.mxu0 0.0
    %1833 = vmatpush2.msra.mxu0 %v1747
    %1834 = vmatprep.mubr.f32.mxu0 %v1729
    %1835 = vmatmul.mubr.f32.gmra.mxu0 %v1727
    %v1836 = vpop.f32.mrf.mxu0
    %v1837 = vadd.f32 %v1768, %v1836
    %v1838 = vpop.f32.mrf.mxu0
    %1839 = vmatprep.mubr.f32.mxu0 %v1730
    %1840 = vmatmul.mubr.f32.gmra.mxu0 %v1728
    %v1841 = vpop.f32.mrf.mxu0
    %v1842 = vadd.f32 %v1768, %v1841
    %v1843 = vpop.f32.mrf.mxu0
    %1844 = vdwg.mxu0
    %1845 = vst.msk [vmem:[#allocation2] sm:$0xff] %vm51, %v1837
    %1846 = vst.msk [vmem:[#allocation2 + $0x8] sm:$0xff] %vm51, %v1842
    // Predicated region
    $region22: #{tpu_custom_call.1} parent=1 // pred_check
      _
    $region23: #{tpu_custom_call.1} parent=1 // pred_check_branch
      %1848 = sbr.rel (0) target = $region25
    $region24: #{tpu_custom_call.1} parent=1 // pred_region
      %s1850 = ssub.s32 256, 256
      %1851 = vsyncadd [#allocation3], %s1850
      %s1852 = sshll.u32 [#allocation2], 4
      %s1853 = int_to_ptr.vmem [resolvable:$true] %s1852
      %1858 = dma.vmem_to_hbm [thread:$0]  %s1853, 256, %s5, [#allocation3], 128, 128, 8
    $region25: #{tpu_custom_call.1} parent=1 // pred_fallthru
      _
    // Predicated region
    $region26: #{tpu_custom_call.1} parent=1 // pred_check
      _
    $region27: #{tpu_custom_call.1} parent=1 // pred_check_branch
      %1860 = sbr.rel (0) target = $region29
    $region28: #{tpu_custom_call.1} parent=1 // pred_region
      %1861 = dma.done [#allocation3], 256
    $region29: #{tpu_custom_call.1} parent=1 // pred_fallthru
      _
    %1862 = vsyncpa [#allocation3], 1

</llo_original>
